<compile_context>
chip_gen: v6e
topology: v6e:2x2x1
jax: 0.10.0
libtpu: 0.0.40
codegen_flags: <defaults>
</compile_context>

<pallas_src>
import functools

import jax
import jax.numpy as jnp
from jax.experimental import pallas as pl
from jax.experimental.pallas import tpu as pltpu

HIDDEN = 64          # per-direction, per-stream GRU hidden size
KPAD = 16            # padded input-feature count (bf16 sublane tile)
FC1 = 128            # fc1 output features
OUT_PAD = 128        # fc2 output padded to a full lane tile (real classes = 2)
BN_EPS = 1e-5

_VMEM_SPEC = pl.BlockSpec(memory_space=pltpu.MemorySpace.VMEM)


# --------------------------------------------------------------------------- #
# Fused Pallas kernel: GRU scans (fwd + one-step bwd, both streams) + BN/FC head
# --------------------------------------------------------------------------- #
def _fused_kernel(x_ref, gw_ref, hw_ref, bias_ref, out_ref, gi_ref,
                  *, T, BP, H, KP):
    """x_ref: [T*BP, KP] f32, time-major (BP rows per timestep, zero-padded).
    gw_ref (bf16): rows [0:KP]=wi_fwd, [KP:2KP]=wi_bwd, [2KP:2KP+2H]=whh_fwd; 6H lanes.
    hw_ref (bf16): rows [0:4H]=fc1(BN-folded), [4H:4H+FC1]=fc2 (lane-padded to OUT_PAD).
    bias_ref (f32, [8, 6H]): row0=bi_fwd, row1=bi_bwd,
                             row2=[bhn_fwd | bhn_bwd | b1], row3=[b2_pad | 0].
    Packed gate layout along the 6H lane axis: [r_s|r_p | n_s|n_p | z_s|z_p]."""
    H2 = 2 * H                                     # stacked hidden width: [sent | price]

    x = x_ref[...]                                 # [T*BP, KP] f32

    # ---- static sub-views of the packed parameter buffers (tile-aligned) -------
    wi_f = gw_ref[0:KP, :]                         # [KP, 6H] bf16
    wi_b = gw_ref[KP:2 * KP, :]                    # [KP, 6H] bf16
    whh = gw_ref[2 * KP:2 * KP + H2, :]            # [2H, 6H] bf16 (block-diagonal)

    bi_f = bias_ref[0:1, :]                        # [1, 6H] f32
    bi_b = bias_ref[1:2, :]
    bhn_f = bias_ref[2:3, 0:H2]                    # [1, 2H]
    bhn_b = bias_ref[2:3, H2:2 * H2]
    b1 = bias_ref[2:3, 2 * H2:2 * H2 + FC1]        # [1, FC1]
    b2 = bias_ref[3:4, 0:OUT_PAD]                  # [1, OUT_PAD]

    # ---- forward direction: hoisted input projection, staged to VMEM scratch ---
    gi_ref[...] = (jnp.dot(x.astype(jnp.bfloat16), wi_f,
                           preferred_element_type=jnp.float32) + bi_f)

    h = jnp.zeros((BP, H2), jnp.float32)           # [h_sent | h_price]
    for t in range(T):                             # static -> fully unrolled
        gi_t = gi_ref[t * BP:(t + 1) * BP, :]      # [BP, 6H] f32, 8-row aligned reload
        gh = jnp.dot(h.astype(jnp.bfloat16), whh,
                     preferred_element_type=jnp.float32)                # [BP, 6H]
        r = jax.nn.sigmoid(gi_t[:, 0:H2] + gh[:, 0:H2])
        n = jnp.tanh(gi_t[:, H2:2 * H2] + r * (gh[:, H2:2 * H2] + bhn_f))
        z = jax.nn.sigmoid(gi_t[:, 2 * H2:] + gh[:, 2 * H2:])
        h = (1.0 - z) * n + z * h                  # [BP, 2H] = [s_fwd | p_fwd]

    # ---- reverse direction: single step on x[:, -1] from h0 = 0 ----------------
    x_last = x[(T - 1) * BP:, :]                   # [BP, KP] (8-row aligned f32 slice)
    gi_b = (jnp.dot(x_last.astype(jnp.bfloat16), wi_b,
                    preferred_element_type=jnp.float32) + bi_b)
    r_b = jax.nn.sigmoid(gi_b[:, 0:H2])
    n_b = jnp.tanh(gi_b[:, H2:2 * H2] + r_b * bhn_b)
    z_b = jax.nn.sigmoid(gi_b[:, 2 * H2:])
    h_b = (1.0 - z_b) * n_b                        # [BP, 2H] = [s_bwd | p_bwd]

    # ---- head: BN folded into fc1; dropout == identity (eval) ------------------
    feat = jnp.concatenate([h, h_b], axis=1)       # [BP, 4H]: s_fwd|p_fwd|s_bwd|p_bwd
    w1 = hw_ref[0:4 * H, :]                        # [4H, FC1] bf16
    w2 = hw_ref[4 * H:4 * H + FC1, :]              # [FC1, OUT_PAD] bf16
    hid = jnp.dot(feat.astype(jnp.bfloat16), w1,
                  preferred_element_type=jnp.float32) + b1
    hid = jnp.maximum(hid, 0.0)
    logits = jnp.dot(hid.astype(jnp.bfloat16), w2,
                     preferred_element_type=jnp.float32) + b2
    out_ref[...] = logits                          # full-tile [BP, OUT_PAD] store


# --------------------------------------------------------------------------- #
# Parameter construction (PyTorch-default-style init) + kernel-layout packing
# --------------------------------------------------------------------------- #
def _uniform(key, shape, bound):
    return jax.random.uniform(key, shape, jnp.float32, -bound, bound)


def _init_gru_direction_torch(key, input_size, hidden):
    """PyTorch nn.GRU layout: weight_ih [3H,I], weight_hh [3H,H], biases [3H] (r,z,n)."""
    k = 1.0 / float(hidden) ** 0.5
    ks = jax.random.split(key, 4)
    return (_uniform(ks[0], (3 * hidden, input_size), k),
            _uniform(ks[1], (3 * hidden, hidden), k),
            _uniform(ks[2], (3 * hidden,), k),
            _uniform(ks[3], (3 * hidden,), k))


def _init_linear_torch(key, in_f, out_f):
    k = 1.0 / float(in_f) ** 0.5
    k1, k2 = jax.random.split(key)
    return _uniform(k1, (out_f, in_f), k), _uniform(k2, (out_f,), k)


def _bn_scale_shift(num_features):
    # gamma=1, beta=0, running_mean=0, running_var=1 (PyTorch defaults, eval mode)
    gamma = jnp.ones((num_features,), jnp.float32)
    beta = jnp.zeros((num_features,), jnp.float32)
    mean = jnp.zeros((num_features,), jnp.float32)
    var = jnp.ones((num_features,), jnp.float32)
    scale = gamma / jnp.sqrt(var + BN_EPS)
    shift = beta - mean * scale
    return scale, shift


def _pack_gru_direction(sent_dir, price_dir, Is, Ip, H, KP):
    """Pack one direction of both GRUs (sentiment, price) into block-structured weights.

    Packed gate order along the 6H axis: [r | n | z] (PyTorch stores [r, z, n]).
    Returns (W_i [KP, 6H] zero-padded K, b_i [1, 6H] (r/z absorb hidden-side biases),
             W_hh [2H, 6H] block-diagonal, b_hn [1, 2H])."""
    wih_s, whh_s, bih_s, bhh_s = sent_dir
    wih_p, whh_p, bih_p, bhh_p = price_dir
    H2 = 2 * H
    torch_gate = (0, 2, 1)                               # packed block g <- torch gate
    w_i = jnp.zeros((KP, 3 * H2), jnp.float32)
    w_h = jnp.zeros((H2, 3 * H2), jnp.float32)
    for g, tg in enumerate(torch_gate):
        lo = g * H2
        w_i = w_i.at[:Is, lo:lo + H].set(wih_s[tg * H:(tg + 1) * H, :].T)
        w_i = w_i.at[Is:Is + Ip, lo + H:lo + H2].set(wih_p[tg * H:(tg + 1) * H, :].T)
        w_h = w_h.at[:H, lo:lo + H].set(whh_s[tg * H:(tg + 1) * H, :].T)
        w_h = w_h.at[H:, lo + H:lo + H2].set(whh_p[tg * H:(tg + 1) * H, :].T)

    def cat(b_s, b_p, tg):
        return jnp.concatenate([b_s[tg * H:(tg + 1) * H], b_p[tg * H:(tg + 1) * H]])

    br = cat(bih_s, bih_p, 0) + cat(bhh_s, bhh_p, 0)     # r: input + hidden biases
    bn_ = cat(bih_s, bih_p, 2)                           # n: input-side bias only
    bz = cat(bih_s, bih_p, 1) + cat(bhh_s, bhh_p, 1)     # z: input + hidden biases
    b_i = jnp.concatenate([br, bn_, bz]).reshape(1, 3 * H2)
    bhn = cat(bhh_s, bhh_p, 2).reshape(1, H2)            # n: hidden-side bias (inside r*)
    return w_i, b_i, w_h, bhn


def _pack_head(k_fc1, k_fc2, H):
    """fc1/fc2 in kernel layout: bn_sentiment/bn_price/bn1 (eval) folded into fc1, rows
    permuted to kernel feature order [s_fwd | p_fwd | s_bwd | p_bwd], fc2 lane-padded."""
    H2, H4 = 2 * H, 4 * H
    W1, b1 = _init_linear_torch(k_fc1, H4, FC1)          # PyTorch [128, 256], [128]
    W2, b2 = _init_linear_torch(k_fc2, FC1, 2)           # PyTorch [2, 128], [2]
    s_s, t_s = _bn_scale_shift(H2)                       # bn_sentiment
    s_p, t_p = _bn_scale_shift(H2)                       # bn_price
    s1, t1 = _bn_scale_shift(FC1)                        # bn1

    # PyTorch feature order: [s_fwd | s_bwd | p_fwd | p_bwd]; kernel: [s_fwd|p_fwd|s_bwd|p_bwd]
    perm = jnp.concatenate([jnp.arange(0, H), jnp.arange(2 * H, 3 * H),
                            jnp.arange(H, 2 * H), jnp.arange(3 * H, 4 * H)])
    s_bn = jnp.concatenate([s_s, s_p])[perm]
    t_bn = jnp.concatenate([t_s, t_p])[perm]
    W1k = W1.T[perm, :]                                  # [4H, FC1], permuted rows

    w1_f = s_bn[:, None] * W1k * s1[None, :]
    b1_f = ((t_bn @ W1k + b1) * s1 + t1).reshape(1, FC1)
    w2_pad = jnp.zeros((FC1, OUT_PAD), jnp.float32).at[:, :2].set(W2.T)
    b2_pad = jnp.zeros((1, OUT_PAD), jnp.float32).at[:, :2].set(b2.reshape(1, 2))
    return w1_f, b1_f, w2_pad, b2_pad


def init_params(key, input_size):
    Is, Ip = input_size
    H = HIDDEN
    H2, H6 = 2 * H, 6 * H
    ks = jax.random.split(key, 6)
    s_fwd = _init_gru_direction_torch(ks[0], Is, H)
    s_bwd = _init_gru_direction_torch(ks[1], Is, H)
    p_fwd = _init_gru_direction_torch(ks[2], Ip, H)
    p_bwd = _init_gru_direction_torch(ks[3], Ip, H)

    wi_f, bi_f, whh_f, bhn_f = _pack_gru_direction(s_fwd, p_fwd, Is, Ip, H, KPAD)
    wi_b, bi_b, _whh_b, bhn_b = _pack_gru_direction(s_bwd, p_bwd, Is, Ip, H, KPAD)
    # _whh_b unused: the reverse direction runs exactly ONE step from h0 = 0, so its
    # hidden-side matmul contributes exactly zero.

    w1_f, b1_f, w2_pad, b2_pad = _pack_head(ks[4], ks[5], H)

    # ---- one bf16 GRU-weight buffer: [wi_fwd | wi_bwd | whh_fwd] along sublanes ----
    gru_w = jnp.concatenate([wi_f, wi_b, whh_f], axis=0).astype(jnp.bfloat16)   # [2K+2H, 6H]
    # ---- one bf16 head-weight buffer: [fc1(folded) | fc2(padded)] -------------------
    head_w = jnp.concatenate([w1_f, w2_pad], axis=0).astype(jnp.bfloat16)       # [4H+FC1, 128]
    # ---- one f32 bias buffer ---------------------------------------------------------
    biases = jnp.zeros((8, H6), jnp.float32)
    biases = biases.at[0:1, :].set(bi_f)
    biases = biases.at[1:2, :].set(bi_b)
    biases = biases.at[2, 0:H2].set(bhn_f[0])
    biases = biases.at[2, H2:2 * H2].set(bhn_b[0])
    biases = biases.at[2, 2 * H2:2 * H2 + FC1].set(b1_f[0])
    biases = biases.at[3, 0:OUT_PAD].set(b2_pad[0])
    return gru_w, head_w, biases


# --------------------------------------------------------------------------- #
# Full forward (single fused pallas_call, 4 prologue DMAs)
# --------------------------------------------------------------------------- #
@functools.partial(jax.jit, static_argnames=("input_size",))
def bilstm_1_fc_2_forward(sentiment_seq, price_seq, params, *, input_size):
    # sentiment_seq: [B, T] if input_size[0] == 1 else [B, T, Is]; price_seq: [B, T, Ip]
    if input_size[0] == 1 and sentiment_seq.ndim == 2:
        sentiment_seq = sentiment_seq[..., None]
    B, T, Is = sentiment_seq.shape
    Ip = price_seq.shape[-1]
    assert Is + Ip <= KPAD, "feature count exceeds packed K padding"
    BP = max(8, ((B + 7) // 8) * 8)                      # pad batch to a sublane tile

    x = jnp.concatenate([sentiment_seq.astype(jnp.float32),
                         price_seq.astype(jnp.float32)], axis=-1)     # [B, T, Is+Ip]
    x = jnp.transpose(x, (1, 0, 2))                                   # [T, B, Is+Ip]
    x = jnp.pad(x, ((0, 0), (0, BP - B), (0, KPAD - (Is + Ip))))      # zero-pad batch & K
    x = x.reshape(T * BP, KPAD)                                       # time-major rows

    gru_w, head_w, biases = params
    kernel = functools.partial(_fused_kernel, T=T, BP=BP, H=HIDDEN, KP=KPAD)
    logits = pl.pallas_call(
        kernel,
        out_shape=jax.ShapeDtypeStruct((BP, OUT_PAD), jnp.float32),
        in_specs=[_VMEM_SPEC] * 4,
        out_specs=_VMEM_SPEC,
        scratch_shapes=[pltpu.VMEM((T * BP, 6 * HIDDEN), jnp.float32)],
    )(x, gru_w, head_w, biases)
    return logits[:B, :2]                                # drop padded rows / lanes


# --------------------------------------------------------------------------- #
if __name__ == "__main__":
    B, T = 2, 8
    input_size = (1, 3)   # sentiment scalar per step (unsqueeze path), price is 3-dim

    root = jax.random.PRNGKey(0)
    k_param, k_sent, k_price = jax.random.split(root, 3)

    params = init_params(k_param, input_size)
    sentiment_seq = jax.random.normal(k_sent, (B, T), jnp.float32)            # [B, T]
    price_seq = jax.random.normal(k_price, (B, T, input_size[1]), jnp.float32)

    logits = bilstm_1_fc_2_forward(sentiment_seq, price_seq, params,
                                   input_size=input_size)
    logits = jax.block_until_ready(logits)
    assert logits.shape == (B, 2) and logits.dtype == jnp.float32
    print("KERNEL_OK")
</pallas_src>

<mosaic_0001>
module attributes {stable_mosaic.version = 11 : i64} {
  func.func @_fused_kernel(%arg0: memref<64x16xf32, #tpu.memory_space<vmem>>, %arg1: memref<160x384xbf16, #tpu.memory_space<vmem>>, %arg2: memref<384x128xbf16, #tpu.memory_space<vmem>>, %arg3: memref<8x384xf32, #tpu.memory_space<vmem>>, %arg4: memref<8x128xf32, #tpu.memory_space<vmem>>, %arg5: memref<64x384xf32, #tpu.memory_space<vmem>>) attributes {dimension_semantics = [], scalar_prefetch = 0 : i64, scratch_operands = 1 : i64, tpu.core_type = #tpu.core_type<tc>} {
    %c0 = arith.constant 0 : index
    %c0_0 = arith.constant 0 : index
    %0 = vector.load %arg0[%c0, %c0_0] : memref<64x16xf32, #tpu.memory_space<vmem>>, vector<64x16xf32>
    %c0_1 = arith.constant 0 : index
    %c0_2 = arith.constant 0 : index
    %1 = vector.load %arg1[%c0_1, %c0_2] : memref<160x384xbf16, #tpu.memory_space<vmem>>, vector<16x384xbf16>
    %c16 = arith.constant 16 : index
    %c0_3 = arith.constant 0 : index
    %2 = vector.load %arg1[%c16, %c0_3] : memref<160x384xbf16, #tpu.memory_space<vmem>>, vector<16x384xbf16>
    %c32 = arith.constant 32 : index
    %c0_4 = arith.constant 0 : index
    %3 = vector.load %arg1[%c32, %c0_4] : memref<160x384xbf16, #tpu.memory_space<vmem>>, vector<128x384xbf16>
    %c0_5 = arith.constant 0 : index
    %c0_6 = arith.constant 0 : index
    %4 = vector.load %arg3[%c0_5, %c0_6] : memref<8x384xf32, #tpu.memory_space<vmem>>, vector<1x384xf32>
    %c1 = arith.constant 1 : index
    %c0_7 = arith.constant 0 : index
    %5 = vector.load %arg3[%c1, %c0_7] : memref<8x384xf32, #tpu.memory_space<vmem>>, vector<1x384xf32>
    %c2 = arith.constant 2 : index
    %c0_8 = arith.constant 0 : index
    %6 = vector.load %arg3[%c2, %c0_8] : memref<8x384xf32, #tpu.memory_space<vmem>>, vector<1x128xf32>
    %c2_9 = arith.constant 2 : index
    %c128 = arith.constant 128 : index
    %7 = vector.load %arg3[%c2_9, %c128] : memref<8x384xf32, #tpu.memory_space<vmem>>, vector<1x128xf32>
    %c2_10 = arith.constant 2 : index
    %c256 = arith.constant 256 : index
    %8 = vector.load %arg3[%c2_10, %c256] : memref<8x384xf32, #tpu.memory_space<vmem>>, vector<1x128xf32>
    %c3 = arith.constant 3 : index
    %c0_11 = arith.constant 0 : index
    %9 = vector.load %arg3[%c3, %c0_11] : memref<8x384xf32, #tpu.memory_space<vmem>>, vector<1x128xf32>
    %10 = arith.truncf %0 : vector<64x16xf32> to vector<64x16xbf16>
    %cst = arith.constant dense<0.000000e+00> : vector<64x384xf32>
    %11 = tpu.matmul %10, %1, %cst {dimension_numbers = #tpu.dot_dimension_numbers<[1], [0], [0], [1], [0, 0, 1, 1], [], []>} : vector<64x16xbf16>, vector<16x384xbf16>, vector<64x384xf32> -> vector<64x384xf32>
    %12 = vector.broadcast %4 : vector<1x384xf32> to vector<64x384xf32>
    %13 = arith.addf %11, %12 : vector<64x384xf32>
    %c0_12 = arith.constant 0 : index
    %c0_13 = arith.constant 0 : index
    %14 = vector.load %arg5[%c0_12, %c0_13] : memref<64x384xf32, #tpu.memory_space<vmem>>, vector<64x384xf32>
    tpu.vector_store %arg5[%c0_12, %c0_13], %13 {strides = array<i32>} : memref<64x384xf32, #tpu.memory_space<vmem>>, vector<64x384xf32>,
    %cst_14 = arith.constant 0.000000e+00 : f32
    %15 = vector.broadcast %cst_14 : f32 to vector<8x128xf32>
    %c0_15 = arith.constant 0 : index
    %c0_16 = arith.constant 0 : index
    %16 = vector.load %arg5[%c0_15, %c0_16] : memref<64x384xf32, #tpu.memory_space<vmem>>, vector<8x384xf32>
    %17 = arith.truncf %15 : vector<8x128xf32> to vector<8x128xbf16>
    %cst_17 = arith.constant dense<0.000000e+00> : vector<8x384xf32>
    %18 = tpu.matmul %17, %3, %cst_17 {dimension_numbers = #tpu.dot_dimension_numbers<[1], [0], [0], [1], [0, 0, 1, 1], [], []>} : vector<8x128xbf16>, vector<128x384xbf16>, vector<8x384xf32> -> vector<8x384xf32>
    %19 = vector.extract_strided_slice %16 {offsets = [0, 0], sizes = [8, 128], strides = [1, 1]} : vector<8x384xf32> to vector<8x128xf32>
    %20 = vector.extract_strided_slice %18 {offsets = [0, 0], sizes = [8, 128], strides = [1, 1]} : vector<8x384xf32> to vector<8x128xf32>
    %21 = arith.addf %19, %20 : vector<8x128xf32>
    %22 = arith.negf %21 : vector<8x128xf32>
    %23 = math.exp %22 : vector<8x128xf32>
    %cst_18 = arith.constant 1.000000e+00 : f32
    %24 = vector.broadcast %cst_18 : f32 to vector<8x128xf32>
    %25 = arith.addf %24, %23 : vector<8x128xf32>
    %26 = arith.divf %24, %25 : vector<8x128xf32>
    %27 = vector.extract_strided_slice %16 {offsets = [0, 128], sizes = [8, 128], strides = [1, 1]} : vector<8x384xf32> to vector<8x128xf32>
    %28 = vector.extract_strided_slice %18 {offsets = [0, 128], sizes = [8, 128], strides = [1, 1]} : vector<8x384xf32> to vector<8x128xf32>
    %29 = vector.broadcast %6 : vector<1x128xf32> to vector<8x128xf32>
    %30 = arith.addf %28, %29 : vector<8x128xf32>
    %31 = arith.mulf %26, %30 : vector<8x128xf32>
    %32 = arith.addf %27, %31 : vector<8x128xf32>
    %33 = math.tanh %32 : vector<8x128xf32>
    %34 = vector.extract_strided_slice %16 {offsets = [0, 256], sizes = [8, 128], strides = [1, 1]} : vector<8x384xf32> to vector<8x128xf32>
    %35 = vector.extract_strided_slice %18 {offsets = [0, 256], sizes = [8, 128], strides = [1, 1]} : vector<8x384xf32> to vector<8x128xf32>
    %36 = arith.addf %34, %35 : vector<8x128xf32>
    %37 = arith.negf %36 : vector<8x128xf32>
    %38 = math.exp %37 : vector<8x128xf32>
    %cst_19 = arith.constant 1.000000e+00 : f32
    %39 = vector.broadcast %cst_19 : f32 to vector<8x128xf32>
    %40 = arith.addf %39, %38 : vector<8x128xf32>
    %41 = arith.divf %39, %40 : vector<8x128xf32>
    %cst_20 = arith.constant 1.000000e+00 : f32
    %42 = vector.broadcast %cst_20 : f32 to vector<8x128xf32>
    %43 = arith.subf %42, %41 : vector<8x128xf32>
    %44 = arith.mulf %43, %33 : vector<8x128xf32>
    %45 = arith.mulf %41, %15 : vector<8x128xf32>
    %46 = arith.addf %44, %45 : vector<8x128xf32>
    %c8 = arith.constant 8 : index
    %c0_21 = arith.constant 0 : index
    %47 = vector.load %arg5[%c8, %c0_21] : memref<64x384xf32, #tpu.memory_space<vmem>>, vector<8x384xf32>
    %48 = arith.truncf %46 : vector<8x128xf32> to vector<8x128xbf16>
    %cst_22 = arith.constant dense<0.000000e+00> : vector<8x384xf32>
    %49 = tpu.matmul %48, %3, %cst_22 {dimension_numbers = #tpu.dot_dimension_numbers<[1], [0], [0], [1], [0, 0, 1, 1], [], []>} : vector<8x128xbf16>, vector<128x384xbf16>, vector<8x384xf32> -> vector<8x384xf32>
    %50 = vector.extract_strided_slice %47 {offsets = [0, 0], sizes = [8, 128], strides = [1, 1]} : vector<8x384xf32> to vector<8x128xf32>
    %51 = vector.extract_strided_slice %49 {offsets = [0, 0], sizes = [8, 128], strides = [1, 1]} : vector<8x384xf32> to vector<8x128xf32>
    %52 = arith.addf %50, %51 : vector<8x128xf32>
    %53 = arith.negf %52 : vector<8x128xf32>
    %54 = math.exp %53 : vector<8x128xf32>
    %cst_23 = arith.constant 1.000000e+00 : f32
    %55 = vector.broadcast %cst_23 : f32 to vector<8x128xf32>
    %56 = arith.addf %55, %54 : vector<8x128xf32>
    %57 = arith.divf %55, %56 : vector<8x128xf32>
    %58 = vector.extract_strided_slice %47 {offsets = [0, 128], sizes = [8, 128], strides = [1, 1]} : vector<8x384xf32> to vector<8x128xf32>
    %59 = vector.extract_strided_slice %49 {offsets = [0, 128], sizes = [8, 128], strides = [1, 1]} : vector<8x384xf32> to vector<8x128xf32>
    %60 = vector.broadcast %6 : vector<1x128xf32> to vector<8x128xf32>
    %61 = arith.addf %59, %60 : vector<8x128xf32>
    %62 = arith.mulf %57, %61 : vector<8x128xf32>
    %63 = arith.addf %58, %62 : vector<8x128xf32>
    %64 = math.tanh %63 : vector<8x128xf32>
    %65 = vector.extract_strided_slice %47 {offsets = [0, 256], sizes = [8, 128], strides = [1, 1]} : vector<8x384xf32> to vector<8x128xf32>
    %66 = vector.extract_strided_slice %49 {offsets = [0, 256], sizes = [8, 128], strides = [1, 1]} : vector<8x384xf32> to vector<8x128xf32>
    %67 = arith.addf %65, %66 : vector<8x128xf32>
    %68 = arith.negf %67 : vector<8x128xf32>
    %69 = math.exp %68 : vector<8x128xf32>
    %cst_24 = arith.constant 1.000000e+00 : f32
    %70 = vector.broadcast %cst_24 : f32 to vector<8x128xf32>
    %71 = arith.addf %70, %69 : vector<8x128xf32>
    %72 = arith.divf %70, %71 : vector<8x128xf32>
    %cst_25 = arith.constant 1.000000e+00 : f32
    %73 = vector.broadcast %cst_25 : f32 to vector<8x128xf32>
    %74 = arith.subf %73, %72 : vector<8x128xf32>
    %75 = arith.mulf %74, %64 : vector<8x128xf32>
    %76 = arith.mulf %72, %46 : vector<8x128xf32>
    %77 = arith.addf %75, %76 : vector<8x128xf32>
    %c16_26 = arith.constant 16 : index
    %c0_27 = arith.constant 0 : index
    %78 = vector.load %arg5[%c16_26, %c0_27] : memref<64x384xf32, #tpu.memory_space<vmem>>, vector<8x384xf32>
    %79 = arith.truncf %77 : vector<8x128xf32> to vector<8x128xbf16>
    %cst_28 = arith.constant dense<0.000000e+00> : vector<8x384xf32>
    %80 = tpu.matmul %79, %3, %cst_28 {dimension_numbers = #tpu.dot_dimension_numbers<[1], [0], [0], [1], [0, 0, 1, 1], [], []>} : vector<8x128xbf16>, vector<128x384xbf16>, vector<8x384xf32> -> vector<8x384xf32>
    %81 = vector.extract_strided_slice %78 {offsets = [0, 0], sizes = [8, 128], strides = [1, 1]} : vector<8x384xf32> to vector<8x128xf32>
    %82 = vector.extract_strided_slice %80 {offsets = [0, 0], sizes = [8, 128], strides = [1, 1]} : vector<8x384xf32> to vector<8x128xf32>
    %83 = arith.addf %81, %82 : vector<8x128xf32>
    %84 = arith.negf %83 : vector<8x128xf32>
    %85 = math.exp %84 : vector<8x128xf32>
    %cst_29 = arith.constant 1.000000e+00 : f32
    %86 = vector.broadcast %cst_29 : f32 to vector<8x128xf32>
    %87 = arith.addf %86, %85 : vector<8x128xf32>
    %88 = arith.divf %86, %87 : vector<8x128xf32>
    %89 = vector.extract_strided_slice %78 {offsets = [0, 128], sizes = [8, 128], strides = [1, 1]} : vector<8x384xf32> to vector<8x128xf32>
    %90 = vector.extract_strided_slice %80 {offsets = [0, 128], sizes = [8, 128], strides = [1, 1]} : vector<8x384xf32> to vector<8x128xf32>
    %91 = vector.broadcast %6 : vector<1x128xf32> to vector<8x128xf32>
    %92 = arith.addf %90, %91 : vector<8x128xf32>
    %93 = arith.mulf %88, %92 : vector<8x128xf32>
    %94 = arith.addf %89, %93 : vector<8x128xf32>
    %95 = math.tanh %94 : vector<8x128xf32>
    %96 = vector.extract_strided_slice %78 {offsets = [0, 256], sizes = [8, 128], strides = [1, 1]} : vector<8x384xf32> to vector<8x128xf32>
    %97 = vector.extract_strided_slice %80 {offsets = [0, 256], sizes = [8, 128], strides = [1, 1]} : vector<8x384xf32> to vector<8x128xf32>
    %98 = arith.addf %96, %97 : vector<8x128xf32>
    %99 = arith.negf %98 : vector<8x128xf32>
    %100 = math.exp %99 : vector<8x128xf32>
    %cst_30 = arith.constant 1.000000e+00 : f32
    %101 = vector.broadcast %cst_30 : f32 to vector<8x128xf32>
    %102 = arith.addf %101, %100 : vector<8x128xf32>
    %103 = arith.divf %101, %102 : vector<8x128xf32>
    %cst_31 = arith.constant 1.000000e+00 : f32
    %104 = vector.broadcast %cst_31 : f32 to vector<8x128xf32>
    %105 = arith.subf %104, %103 : vector<8x128xf32>
    %106 = arith.mulf %105, %95 : vector<8x128xf32>
    %107 = arith.mulf %103, %77 : vector<8x128xf32>
    %108 = arith.addf %106, %107 : vector<8x128xf32>
    %c24 = arith.constant 24 : index
    %c0_32 = arith.constant 0 : index
    %109 = vector.load %arg5[%c24, %c0_32] : memref<64x384xf32, #tpu.memory_space<vmem>>, vector<8x384xf32>
    %110 = arith.truncf %108 : vector<8x128xf32> to vector<8x128xbf16>
    %cst_33 = arith.constant dense<0.000000e+00> : vector<8x384xf32>
    %111 = tpu.matmul %110, %3, %cst_33 {dimension_numbers = #tpu.dot_dimension_numbers<[1], [0], [0], [1], [0, 0, 1, 1], [], []>} : vector<8x128xbf16>, vector<128x384xbf16>, vector<8x384xf32> -> vector<8x384xf32>
    %112 = vector.extract_strided_slice %109 {offsets = [0, 0], sizes = [8, 128], strides = [1, 1]} : vector<8x384xf32> to vector<8x128xf32>
    %113 = vector.extract_strided_slice %111 {offsets = [0, 0], sizes = [8, 128], strides = [1, 1]} : vector<8x384xf32> to vector<8x128xf32>
    %114 = arith.addf %112, %113 : vector<8x128xf32>
    %115 = arith.negf %114 : vector<8x128xf32>
    %116 = math.exp %115 : vector<8x128xf32>
    %cst_34 = arith.constant 1.000000e+00 : f32
    %117 = vector.broadcast %cst_34 : f32 to vector<8x128xf32>
    %118 = arith.addf %117, %116 : vector<8x128xf32>
    %119 = arith.divf %117, %118 : vector<8x128xf32>
    %120 = vector.extract_strided_slice %109 {offsets = [0, 128], sizes = [8, 128], strides = [1, 1]} : vector<8x384xf32> to vector<8x128xf32>
    %121 = vector.extract_strided_slice %111 {offsets = [0, 128], sizes = [8, 128], strides = [1, 1]} : vector<8x384xf32> to vector<8x128xf32>
    %122 = vector.broadcast %6 : vector<1x128xf32> to vector<8x128xf32>
    %123 = arith.addf %121, %122 : vector<8x128xf32>
    %124 = arith.mulf %119, %123 : vector<8x128xf32>
    %125 = arith.addf %120, %124 : vector<8x128xf32>
    %126 = math.tanh %125 : vector<8x128xf32>
    %127 = vector.extract_strided_slice %109 {offsets = [0, 256], sizes = [8, 128], strides = [1, 1]} : vector<8x384xf32> to vector<8x128xf32>
    %128 = vector.extract_strided_slice %111 {offsets = [0, 256], sizes = [8, 128], strides = [1, 1]} : vector<8x384xf32> to vector<8x128xf32>
    %129 = arith.addf %127, %128 : vector<8x128xf32>
    %130 = arith.negf %129 : vector<8x128xf32>
    %131 = math.exp %130 : vector<8x128xf32>
    %cst_35 = arith.constant 1.000000e+00 : f32
    %132 = vector.broadcast %cst_35 : f32 to vector<8x128xf32>
    %133 = arith.addf %132, %131 : vector<8x128xf32>
    %134 = arith.divf %132, %133 : vector<8x128xf32>
    %cst_36 = arith.constant 1.000000e+00 : f32
    %135 = vector.broadcast %cst_36 : f32 to vector<8x128xf32>
    %136 = arith.subf %135, %134 : vector<8x128xf32>
    %137 = arith.mulf %136, %126 : vector<8x128xf32>
    %138 = arith.mulf %134, %108 : vector<8x128xf32>
    %139 = arith.addf %137, %138 : vector<8x128xf32>
    %c32_37 = arith.constant 32 : index
    %c0_38 = arith.constant 0 : index
    %140 = vector.load %arg5[%c32_37, %c0_38] : memref<64x384xf32, #tpu.memory_space<vmem>>, vector<8x384xf32>
    %141 = arith.truncf %139 : vector<8x128xf32> to vector<8x128xbf16>
    %cst_39 = arith.constant dense<0.000000e+00> : vector<8x384xf32>
    %142 = tpu.matmul %141, %3, %cst_39 {dimension_numbers = #tpu.dot_dimension_numbers<[1], [0], [0], [1], [0, 0, 1, 1], [], []>} : vector<8x128xbf16>, vector<128x384xbf16>, vector<8x384xf32> -> vector<8x384xf32>
    %143 = vector.extract_strided_slice %140 {offsets = [0, 0], sizes = [8, 128], strides = [1, 1]} : vector<8x384xf32> to vector<8x128xf32>
    %144 = vector.extract_strided_slice %142 {offsets = [0, 0], sizes = [8, 128], strides = [1, 1]} : vector<8x384xf32> to vector<8x128xf32>
    %145 = arith.addf %143, %144 : vector<8x128xf32>
    %146 = arith.negf %145 : vector<8x128xf32>
    %147 = math.exp %146 : vector<8x128xf32>
    %cst_40 = arith.constant 1.000000e+00 : f32
    %148 = vector.broadcast %cst_40 : f32 to vector<8x128xf32>
    %149 = arith.addf %148, %147 : vector<8x128xf32>
    %150 = arith.divf %148, %149 : vector<8x128xf32>
    %151 = vector.extract_strided_slice %140 {offsets = [0, 128], sizes = [8, 128], strides = [1, 1]} : vector<8x384xf32> to vector<8x128xf32>
    %152 = vector.extract_strided_slice %142 {offsets = [0, 128], sizes = [8, 128], strides = [1, 1]} : vector<8x384xf32> to vector<8x128xf32>
    %153 = vector.broadcast %6 : vector<1x128xf32> to vector<8x128xf32>
    %154 = arith.addf %152, %153 : vector<8x128xf32>
    %155 = arith.mulf %150, %154 : vector<8x128xf32>
    %156 = arith.addf %151, %155 : vector<8x128xf32>
    %157 = math.tanh %156 : vector<8x128xf32>
    %158 = vector.extract_strided_slice %140 {offsets = [0, 256], sizes = [8, 128], strides = [1, 1]} : vector<8x384xf32> to vector<8x128xf32>
    %159 = vector.extract_strided_slice %142 {offsets = [0, 256], sizes = [8, 128], strides = [1, 1]} : vector<8x384xf32> to vector<8x128xf32>
    %160 = arith.addf %158, %159 : vector<8x128xf32>
    %161 = arith.negf %160 : vector<8x128xf32>
    %162 = math.exp %161 : vector<8x128xf32>
    %cst_41 = arith.constant 1.000000e+00 : f32
    %163 = vector.broadcast %cst_41 : f32 to vector<8x128xf32>
    %164 = arith.addf %163, %162 : vector<8x128xf32>
    %165 = arith.divf %163, %164 : vector<8x128xf32>
    %cst_42 = arith.constant 1.000000e+00 : f32
    %166 = vector.broadcast %cst_42 : f32 to vector<8x128xf32>
    %167 = arith.subf %166, %165 : vector<8x128xf32>
    %168 = arith.mulf %167, %157 : vector<8x128xf32>
    %169 = arith.mulf %165, %139 : vector<8x128xf32>
    %170 = arith.addf %168, %169 : vector<8x128xf32>
    %c40 = arith.constant 40 : index
    %c0_43 = arith.constant 0 : index
    %171 = vector.load %arg5[%c40, %c0_43] : memref<64x384xf32, #tpu.memory_space<vmem>>, vector<8x384xf32>
    %172 = arith.truncf %170 : vector<8x128xf32> to vector<8x128xbf16>
    %cst_44 = arith.constant dense<0.000000e+00> : vector<8x384xf32>
    %173 = tpu.matmul %172, %3, %cst_44 {dimension_numbers = #tpu.dot_dimension_numbers<[1], [0], [0], [1], [0, 0, 1, 1], [], []>} : vector<8x128xbf16>, vector<128x384xbf16>, vector<8x384xf32> -> vector<8x384xf32>
    %174 = vector.extract_strided_slice %171 {offsets = [0, 0], sizes = [8, 128], strides = [1, 1]} : vector<8x384xf32> to vector<8x128xf32>
    %175 = vector.extract_strided_slice %173 {offsets = [0, 0], sizes = [8, 128], strides = [1, 1]} : vector<8x384xf32> to vector<8x128xf32>
    %176 = arith.addf %174, %175 : vector<8x128xf32>
    %177 = arith.negf %176 : vector<8x128xf32>
    %178 = math.exp %177 : vector<8x128xf32>
    %cst_45 = arith.constant 1.000000e+00 : f32
    %179 = vector.broadcast %cst_45 : f32 to vector<8x128xf32>
    %180 = arith.addf %179, %178 : vector<8x128xf32>
    %181 = arith.divf %179, %180 : vector<8x128xf32>
    %182 = vector.extract_strided_slice %171 {offsets = [0, 128], sizes = [8, 128], strides = [1, 1]} : vector<8x384xf32> to vector<8x128xf32>
    %183 = vector.extract_strided_slice %173 {offsets = [0, 128], sizes = [8, 128], strides = [1, 1]} : vector<8x384xf32> to vector<8x128xf32>
    %184 = vector.broadcast %6 : vector<1x128xf32> to vector<8x128xf32>
    %185 = arith.addf %183, %184 : vector<8x128xf32>
    %186 = arith.mulf %181, %185 : vector<8x128xf32>
    %187 = arith.addf %182, %186 : vector<8x128xf32>
    %188 = math.tanh %187 : vector<8x128xf32>
    %189 = vector.extract_strided_slice %171 {offsets = [0, 256], sizes = [8, 128], strides = [1, 1]} : vector<8x384xf32> to vector<8x128xf32>
    %190 = vector.extract_strided_slice %173 {offsets = [0, 256], sizes = [8, 128], strides = [1, 1]} : vector<8x384xf32> to vector<8x128xf32>
    %191 = arith.addf %189, %190 : vector<8x128xf32>
    %192 = arith.negf %191 : vector<8x128xf32>
    %193 = math.exp %192 : vector<8x128xf32>
    %cst_46 = arith.constant 1.000000e+00 : f32
    %194 = vector.broadcast %cst_46 : f32 to vector<8x128xf32>
    %195 = arith.addf %194, %193 : vector<8x128xf32>
    %196 = arith.divf %194, %195 : vector<8x128xf32>
    %cst_47 = arith.constant 1.000000e+00 : f32
    %197 = vector.broadcast %cst_47 : f32 to vector<8x128xf32>
    %198 = arith.subf %197, %196 : vector<8x128xf32>
    %199 = arith.mulf %198, %188 : vector<8x128xf32>
    %200 = arith.mulf %196, %170 : vector<8x128xf32>
    %201 = arith.addf %199, %200 : vector<8x128xf32>
    %c48 = arith.constant 48 : index
    %c0_48 = arith.constant 0 : index
    %202 = vector.load %arg5[%c48, %c0_48] : memref<64x384xf32, #tpu.memory_space<vmem>>, vector<8x384xf32>
    %203 = arith.truncf %201 : vector<8x128xf32> to vector<8x128xbf16>
    %cst_49 = arith.constant dense<0.000000e+00> : vector<8x384xf32>
    %204 = tpu.matmul %203, %3, %cst_49 {dimension_numbers = #tpu.dot_dimension_numbers<[1], [0], [0], [1], [0, 0, 1, 1], [], []>} : vector<8x128xbf16>, vector<128x384xbf16>, vector<8x384xf32> -> vector<8x384xf32>
    %205 = vector.extract_strided_slice %202 {offsets = [0, 0], sizes = [8, 128], strides = [1, 1]} : vector<8x384xf32> to vector<8x128xf32>
    %206 = vector.extract_strided_slice %204 {offsets = [0, 0], sizes = [8, 128], strides = [1, 1]} : vector<8x384xf32> to vector<8x128xf32>
    %207 = arith.addf %205, %206 : vector<8x128xf32>
    %208 = arith.negf %207 : vector<8x128xf32>
    %209 = math.exp %208 : vector<8x128xf32>
    %cst_50 = arith.constant 1.000000e+00 : f32
    %210 = vector.broadcast %cst_50 : f32 to vector<8x128xf32>
    %211 = arith.addf %210, %209 : vector<8x128xf32>
    %212 = arith.divf %210, %211 : vector<8x128xf32>
    %213 = vector.extract_strided_slice %202 {offsets = [0, 128], sizes = [8, 128], strides = [1, 1]} : vector<8x384xf32> to vector<8x128xf32>
    %214 = vector.extract_strided_slice %204 {offsets = [0, 128], sizes = [8, 128], strides = [1, 1]} : vector<8x384xf32> to vector<8x128xf32>
    %215 = vector.broadcast %6 : vector<1x128xf32> to vector<8x128xf32>
    %216 = arith.addf %214, %215 : vector<8x128xf32>
    %217 = arith.mulf %212, %216 : vector<8x128xf32>
    %218 = arith.addf %213, %217 : vector<8x128xf32>
    %219 = math.tanh %218 : vector<8x128xf32>
    %220 = vector.extract_strided_slice %202 {offsets = [0, 256], sizes = [8, 128], strides = [1, 1]} : vector<8x384xf32> to vector<8x128xf32>
    %221 = vector.extract_strided_slice %204 {offsets = [0, 256], sizes = [8, 128], strides = [1, 1]} : vector<8x384xf32> to vector<8x128xf32>
    %222 = arith.addf %220, %221 : vector<8x128xf32>
    %223 = arith.negf %222 : vector<8x128xf32>
    %224 = math.exp %223 : vector<8x128xf32>
    %cst_51 = arith.constant 1.000000e+00 : f32
    %225 = vector.broadcast %cst_51 : f32 to vector<8x128xf32>
    %226 = arith.addf %225, %224 : vector<8x128xf32>
    %227 = arith.divf %225, %226 : vector<8x128xf32>
    %cst_52 = arith.constant 1.000000e+00 : f32
    %228 = vector.broadcast %cst_52 : f32 to vector<8x128xf32>
    %229 = arith.subf %228, %227 : vector<8x128xf32>
    %230 = arith.mulf %229, %219 : vector<8x128xf32>
    %231 = arith.mulf %227, %201 : vector<8x128xf32>
    %232 = arith.addf %230, %231 : vector<8x128xf32>
    %c56 = arith.constant 56 : index
    %c0_53 = arith.constant 0 : index
    %233 = vector.load %arg5[%c56, %c0_53] : memref<64x384xf32, #tpu.memory_space<vmem>>, vector<8x384xf32>
    %234 = arith.truncf %232 : vector<8x128xf32> to vector<8x128xbf16>
    %cst_54 = arith.constant dense<0.000000e+00> : vector<8x384xf32>
    %235 = tpu.matmul %234, %3, %cst_54 {dimension_numbers = #tpu.dot_dimension_numbers<[1], [0], [0], [1], [0, 0, 1, 1], [], []>} : vector<8x128xbf16>, vector<128x384xbf16>, vector<8x384xf32> -> vector<8x384xf32>
    %236 = vector.extract_strided_slice %233 {offsets = [0, 0], sizes = [8, 128], strides = [1, 1]} : vector<8x384xf32> to vector<8x128xf32>
    %237 = vector.extract_strided_slice %235 {offsets = [0, 0], sizes = [8, 128], strides = [1, 1]} : vector<8x384xf32> to vector<8x128xf32>
    %238 = arith.addf %236, %237 : vector<8x128xf32>
    %239 = arith.negf %238 : vector<8x128xf32>
    %240 = math.exp %239 : vector<8x128xf32>
    %cst_55 = arith.constant 1.000000e+00 : f32
    %241 = vector.broadcast %cst_55 : f32 to vector<8x128xf32>
    %242 = arith.addf %241, %240 : vector<8x128xf32>
    %243 = arith.divf %241, %242 : vector<8x128xf32>
    %244 = vector.extract_strided_slice %233 {offsets = [0, 128], sizes = [8, 128], strides = [1, 1]} : vector<8x384xf32> to vector<8x128xf32>
    %245 = vector.extract_strided_slice %235 {offsets = [0, 128], sizes = [8, 128], strides = [1, 1]} : vector<8x384xf32> to vector<8x128xf32>
    %246 = vector.broadcast %6 : vector<1x128xf32> to vector<8x128xf32>
    %247 = arith.addf %245, %246 : vector<8x128xf32>
    %248 = arith.mulf %243, %247 : vector<8x128xf32>
    %249 = arith.addf %244, %248 : vector<8x128xf32>
    %250 = math.tanh %249 : vector<8x128xf32>
    %251 = vector.extract_strided_slice %233 {offsets = [0, 256], sizes = [8, 128], strides = [1, 1]} : vector<8x384xf32> to vector<8x128xf32>
    %252 = vector.extract_strided_slice %235 {offsets = [0, 256], sizes = [8, 128], strides = [1, 1]} : vector<8x384xf32> to vector<8x128xf32>
    %253 = arith.addf %251, %252 : vector<8x128xf32>
    %254 = arith.negf %253 : vector<8x128xf32>
    %255 = math.exp %254 : vector<8x128xf32>
    %cst_56 = arith.constant 1.000000e+00 : f32
    %256 = vector.broadcast %cst_56 : f32 to vector<8x128xf32>
    %257 = arith.addf %256, %255 : vector<8x128xf32>
    %258 = arith.divf %256, %257 : vector<8x128xf32>
    %cst_57 = arith.constant 1.000000e+00 : f32
    %259 = vector.broadcast %cst_57 : f32 to vector<8x128xf32>
    %260 = arith.subf %259, %258 : vector<8x128xf32>
    %261 = arith.mulf %260, %250 : vector<8x128xf32>
    %262 = arith.mulf %258, %232 : vector<8x128xf32>
    %263 = arith.addf %261, %262 : vector<8x128xf32>
    %264 = vector.extract_strided_slice %0 {offsets = [56, 0], sizes = [8, 16], strides = [1, 1]} : vector<64x16xf32> to vector<8x16xf32>
    %265 = arith.truncf %264 : vector<8x16xf32> to vector<8x16xbf16>
    %cst_58 = arith.constant dense<0.000000e+00> : vector<8x384xf32>
    %266 = tpu.matmul %265, %2, %cst_58 {dimension_numbers = #tpu.dot_dimension_numbers<[1], [0], [0], [1], [0, 0, 1, 1], [], []>} : vector<8x16xbf16>, vector<16x384xbf16>, vector<8x384xf32> -> vector<8x384xf32>
    %267 = vector.broadcast %5 : vector<1x384xf32> to vector<8x384xf32>
    %268 = arith.addf %266, %267 : vector<8x384xf32>
    %269 = vector.extract_strided_slice %268 {offsets = [0, 0], sizes = [8, 128], strides = [1, 1]} : vector<8x384xf32> to vector<8x128xf32>
    %270 = arith.negf %269 : vector<8x128xf32>
    %271 = math.exp %270 : vector<8x128xf32>
    %cst_59 = arith.constant 1.000000e+00 : f32
    %272 = vector.broadcast %cst_59 : f32 to vector<8x128xf32>
    %273 = arith.addf %272, %271 : vector<8x128xf32>
    %274 = arith.divf %272, %273 : vector<8x128xf32>
    %275 = vector.extract_strided_slice %268 {offsets = [0, 128], sizes = [8, 128], strides = [1, 1]} : vector<8x384xf32> to vector<8x128xf32>
    %276 = vector.broadcast %7 : vector<1x128xf32> to vector<8x128xf32>
    %277 = arith.mulf %274, %276 : vector<8x128xf32>
    %278 = arith.addf %275, %277 : vector<8x128xf32>
    %279 = math.tanh %278 : vector<8x128xf32>
    %280 = vector.extract_strided_slice %268 {offsets = [0, 256], sizes = [8, 128], strides = [1, 1]} : vector<8x384xf32> to vector<8x128xf32>
    %281 = arith.negf %280 : vector<8x128xf32>
    %282 = math.exp %281 : vector<8x128xf32>
    %cst_60 = arith.constant 1.000000e+00 : f32
    %283 = vector.broadcast %cst_60 : f32 to vector<8x128xf32>
    %284 = arith.addf %283, %282 : vector<8x128xf32>
    %285 = arith.divf %283, %284 : vector<8x128xf32>
    %cst_61 = arith.constant 1.000000e+00 : f32
    %286 = vector.broadcast %cst_61 : f32 to vector<8x128xf32>
    %287 = arith.subf %286, %285 : vector<8x128xf32>
    %288 = arith.mulf %287, %279 : vector<8x128xf32>
    %289 = tpu.concatenate %263, %288 in 1 : vector<8x128xf32>, vector<8x128xf32> -> vector<8x256xf32>
    %c0_62 = arith.constant 0 : index
    %c0_63 = arith.constant 0 : index
    %290 = vector.load %arg2[%c0_62, %c0_63] : memref<384x128xbf16, #tpu.memory_space<vmem>>, vector<256x128xbf16>
    %c256_64 = arith.constant 256 : index
    %c0_65 = arith.constant 0 : index
    %291 = vector.load %arg2[%c256_64, %c0_65] : memref<384x128xbf16, #tpu.memory_space<vmem>>, vector<128x128xbf16>
    %292 = arith.truncf %289 : vector<8x256xf32> to vector<8x256xbf16>
    %cst_66 = arith.constant dense<0.000000e+00> : vector<8x128xf32>
    %293 = tpu.matmul %292, %290, %cst_66 {dimension_numbers = #tpu.dot_dimension_numbers<[1], [0], [0], [1], [0, 0, 1, 1], [], []>} : vector<8x256xbf16>, vector<256x128xbf16>, vector<8x128xf32> -> vector<8x128xf32>
    %294 = vector.broadcast %8 : vector<1x128xf32> to vector<8x128xf32>
    %295 = arith.addf %293, %294 : vector<8x128xf32>
    %cst_67 = arith.constant 0.000000e+00 : f32
    %296 = vector.broadcast %cst_67 : f32 to vector<8x128xf32>
    %297 = arith.maximumf %295, %296 : vector<8x128xf32>
    %298 = arith.truncf %297 : vector<8x128xf32> to vector<8x128xbf16>
    %cst_68 = arith.constant dense<0.000000e+00> : vector<8x128xf32>
    %299 = tpu.matmul %298, %291, %cst_68 {dimension_numbers = #tpu.dot_dimension_numbers<[1], [0], [0], [1], [0, 0, 1, 1], [], []>} : vector<8x128xbf16>, vector<128x128xbf16>, vector<8x128xf32> -> vector<8x128xf32>
    %300 = vector.broadcast %9 : vector<1x128xf32> to vector<8x128xf32>
    %301 = arith.addf %299, %300 : vector<8x128xf32>
    %c0_69 = arith.constant 0 : index
    %c0_70 = arith.constant 0 : index
    %302 = vector.load %arg4[%c0_69, %c0_70] : memref<8x128xf32, #tpu.memory_space<vmem>>, vector<8x128xf32>
    tpu.vector_store %arg4[%c0_69, %c0_70], %301 {strides = array<i32>} : memref<8x128xf32, #tpu.memory_space<vmem>>, vector<8x128xf32>,
    return
  }
}

</mosaic_0001>

<llo_original>
// kernel: bilstm_1_fc_2_forward.1
$region0: #{bilstm_1_fc_2_forward.1}
  #allocation0 [shape = 'u32[]', space=smem, size = 0x4, offset = 0x4, fixed_abs, tag = 'smem constant byte address 0x4 - core index']
  #allocation1 [shape = 'u32[144,128]{1,0:T(1,128)}', space=vmem, size = 0x12000, scoped, tag = 'internal scratch']
  #allocation2 [shape = 'f32[64,384]{1,0:T(8,128)}', space=vmem, size = 0x18000, scoped, tag = 'scratch operand']
  %s0 = inlined_call_operand.vmem [shape: f32[64,16], index: 0, kind: input, shape index: {}]
  %s1 = inlined_call_operand.hbm [shape: bf16[160,384], index: 1, kind: input, shape index: {}]
  %s2 = inlined_call_operand.hbm [shape: bf16[384,128], index: 2, kind: input, shape index: {}]
  %s3 = inlined_call_operand.vmem [shape: f32[8,384], index: 3, kind: input, shape index: {}]
  %s4 = inlined_call_operand.vmem [shape: f32[8,128], index: 4, kind: output, shape index: {}]
  %s5 = sld [smem:[#allocation0]]
  $region34: #{bilstm_1_fc_2_forward.1} parent=0
    _
  %s7 = ssub.s32 1, %s5
  %s8 = scalar_select 0, %s7, %s5
  $region1: #{bilstm_1_fc_2_forward.1} parent=0
    #allocation3 [shape = 'u8[122880]{0}', space=vmem, size = 0x1e000, scoped, tag = 'input window, operand 1, single buffered']
    #allocation4 [shape = 's32[1]{0}', space=sflag, size = 0x4, scoped, tag = 'scoped memory for bilstm_1_fc_2_forward.1']
    #allocation5 [shape = 'u8[98304]{0}', space=vmem, size = 0x18000, scoped, tag = 'input window, operand 2, single buffered']
    #allocation6 [shape = 's32[1]{0}', space=sflag, size = 0x4, scoped, tag = 'scoped memory for bilstm_1_fc_2_forward.1']
    %9 = vsyncpa [#allocation4], 0
    %10 = vsyncpa [#allocation6], 0
    // Predicated region
    $region2: #{bilstm_1_fc_2_forward.1} parent=1 // pred_check
      _
    $region3: #{bilstm_1_fc_2_forward.1} parent=1 // pred_check_branch
      %12 = sbr.rel (0) target = $region5
    $region4: #{bilstm_1_fc_2_forward.1} parent=1 // pred_region
      _
    $region5: #{bilstm_1_fc_2_forward.1} parent=1 // pred_fallthru
      _
    // Predicated region
    $region6: #{bilstm_1_fc_2_forward.1} parent=1 // pred_check
      _
    $region7: #{bilstm_1_fc_2_forward.1} parent=1 // pred_check_branch
      %14 = sbr.rel (0) target = $region9
    $region8: #{bilstm_1_fc_2_forward.1} parent=1 // pred_region
      %s16 = ssub.s32 3840, 3840
      %17 = vsyncadd [#allocation4], %s16
      %s18 = sshll.u32 [#allocation3], 4
      %s19 = int_to_ptr.vmem [resolvable:$true] %s18
      %24 = dma.hbm_to_vmem [thread:$0]  %s1, 3840, %s19, [#allocation4], 192, 192, 12
    $region9: #{bilstm_1_fc_2_forward.1} parent=1 // pred_fallthru
      _
    // Predicated region
    $region10: #{bilstm_1_fc_2_forward.1} parent=1 // pred_check
      _
    $region11: #{bilstm_1_fc_2_forward.1} parent=1 // pred_check_branch
      %26 = sbr.rel (0) target = $region13
    $region12: #{bilstm_1_fc_2_forward.1} parent=1 // pred_region
      %s28 = ssub.s32 3072, 3072
      %29 = vsyncadd [#allocation6], %s28
      %s30 = sshll.u32 [#allocation5], 4
      %s31 = int_to_ptr.vmem [resolvable:$true] %s30
      %36 = dma.hbm_to_vmem [thread:$0]  %s2, 3072, %s31, [#allocation6], 64, 64, 4
    $region13: #{bilstm_1_fc_2_forward.1} parent=1 // pred_fallthru
      _
    // Predicated region
    $region14: #{bilstm_1_fc_2_forward.1} parent=1 // pred_check
      _
    $region15: #{bilstm_1_fc_2_forward.1} parent=1 // pred_check_branch
      %38 = sbr.rel (0) target = $region17
    $region16: #{bilstm_1_fc_2_forward.1} parent=1 // pred_region
      _
    $region17: #{bilstm_1_fc_2_forward.1} parent=1 // pred_fallthru
      _
    // Predicated region
    $region18: #{bilstm_1_fc_2_forward.1} parent=1 // pred_check
      _
    $region19: #{bilstm_1_fc_2_forward.1} parent=1 // pred_check_branch
      %40 = sbr.rel (0) target = $region21
    $region20: #{bilstm_1_fc_2_forward.1} parent=1 // pred_region
      %41 = dma.done [#allocation4], 3840
    $region21: #{bilstm_1_fc_2_forward.1} parent=1 // pred_fallthru
      _
    // Predicated region
    $region22: #{bilstm_1_fc_2_forward.1} parent=1 // pred_check
      _
    $region23: #{bilstm_1_fc_2_forward.1} parent=1 // pred_check_branch
      %43 = sbr.rel (0) target = $region25
    $region24: #{bilstm_1_fc_2_forward.1} parent=1 // pred_region
      %44 = dma.done [#allocation6], 3072
    $region25: #{bilstm_1_fc_2_forward.1} parent=1 // pred_fallthru
      _
    %v46 = vld [vmem:[%s0] sm:$0xff]
    %v47 = vld [vmem:[%s0 + $0x8] sm:$0xff]
    %v48 = vld [vmem:[%s0 + $0x10] sm:$0xff]
    %v49 = vld [vmem:[%s0 + $0x18] sm:$0xff]
    %v50 = vld [vmem:[%s0 + $0x20] sm:$0xff]
    %v51 = vld [vmem:[%s0 + $0x28] sm:$0xff]
    %v52 = vld [vmem:[%s0 + $0x30] sm:$0xff]
    %v53 = vld [vmem:[%s0 + $0x38] sm:$0xff]
    %v54 = vld [vmem:[#allocation3] sm:$0xff]
    %v55 = vld [vmem:[#allocation3 + $0x8] sm:$0xf]
    %v56 = vld [vmem:[#allocation3 + $0xc] sm:$0xff]
    %v57 = vld [vmem:[#allocation3 + $0x14] sm:$0xf]
    %v58 = vld [vmem:[#allocation3 + $0x18] sm:$0xff]
    %v59 = vld [vmem:[#allocation3 + $0x20] sm:$0xf]
    %v60 = vld [vmem:[#allocation3 + $0x24] sm:$0xff]
    %v61 = vld [vmem:[#allocation3 + $0x2c] sm:$0xf]
    %v62 = vld [vmem:[#allocation3 + $0x30] sm:$0xff]
    %v63 = vld [vmem:[#allocation3 + $0x38] sm:$0xf]
    %v64 = vld [vmem:[#allocation3 + $0x3c] sm:$0xff]
    %v65 = vld [vmem:[#allocation3 + $0x44] sm:$0xf]
    %v66 = vld [vmem:[#allocation3 + $0x48] sm:$0xff]
    %v67 = vld [vmem:[#allocation3 + $0x50] sm:$0xf]
    %v68 = vld [vmem:[#allocation3 + $0x54] sm:$0xff]
    %v69 = vld [vmem:[#allocation3 + $0x5c] sm:$0xf]
    %v70 = vld [vmem:[#allocation3 + $0x60] sm:$0xff]
    %v71 = vld [vmem:[#allocation3 + $0x68] sm:$0xf]
    %v72 = vld [vmem:[#allocation3 + $0x6c] sm:$0xff]
    %v73 = vld [vmem:[#allocation3 + $0x74] sm:$0xf]
    %v74 = vld [vmem:[#allocation3 + $0x78] sm:$0xff]
    %v75 = vld [vmem:[#allocation3 + $0x80] sm:$0xf]
    %v76 = vld [vmem:[#allocation3 + $0x84] sm:$0xff]
    %v77 = vld [vmem:[#allocation3 + $0x8c] sm:$0xf]
    %v78 = vld [vmem:[#allocation3 + $0x90] sm:$0xff]
    %v79 = vld [vmem:[#allocation3 + $0x98] sm:$0xf]
    %v80 = vld [vmem:[#allocation3 + $0x9c] sm:$0xff]
    %v81 = vld [vmem:[#allocation3 + $0xa4] sm:$0xf]
    %v82 = vld [vmem:[#allocation3 + $0xa8] sm:$0xff]
    %v83 = vld [vmem:[#allocation3 + $0xb0] sm:$0xf]
    %v84 = vld [vmem:[#allocation3 + $0xb4] sm:$0xff]
    %v85 = vld [vmem:[#allocation3 + $0xbc] sm:$0xf]
    %v86 = vld [vmem:[#allocation3 + $0xc0] sm:$0xff]
    %v87 = vld [vmem:[#allocation3 + $0xc8] sm:$0xf]
    %v88 = vld [vmem:[#allocation3 + $0xcc] sm:$0xff]
    %v89 = vld [vmem:[#allocation3 + $0xd4] sm:$0xf]
    %v90 = vld [vmem:[#allocation3 + $0xd8] sm:$0xff]
    %v91 = vld [vmem:[#allocation3 + $0xe0] sm:$0xf]
    %v92 = vld [vmem:[#allocation3 + $0xe4] sm:$0xff]
    %v93 = vld [vmem:[#allocation3 + $0xec] sm:$0xf]
    %v94 = vld [vmem:[%s3] ss:$8 sm:$0x7]
    %s95 = scalar_lea.vmem %s3, 1
    %v96 = vld [vmem:[%s95] ss:$8 sm:$0x7]
    %v97 = vld [vmem:[%s3 + $0x2] ss:$0 sm:$0xff]
    %v98 = vld [vmem:[%s3 + $0xa] ss:$0 sm:$0xff]
    %v99 = vld [vmem:[%s3 + $0x12] ss:$0 sm:$0xff]
    %v100 = vld [vmem:[%s3 + $0x3] ss:$0 sm:$0xff]
    %v101 = vpack.c.bf16 %v47, %v46
    %v102 = vpack.c.bf16 %v49, %v48
    %v103 = vpack.c.bf16 %v51, %v50
    %v104 = vpack.c.bf16 %v53, %v52
    %v106 = vlaneseq
    %v107 = vshrl.u32 %v106, 7
    %v108 = vsub.s32 0, %v107
    %v109 = vrot.slane %v94, %v108
    %v110 = vlaneseq
    %v111 = vshrl.u32 %v110, 7
    %v112 = vsub.s32 1, %v111
    %v113 = vrot.slane %v94, %v112
    %v114 = vlaneseq
    %v115 = vshrl.u32 %v114, 7
    %v116 = vsub.s32 2, %v115
    %v117 = vrot.slane %v94, %v116
    %v125 = vunpack.c.l.b16 %v54
    %v126 = vunpack.c.h.b16 %v54
    %v127 = vunpack.c.l.b16 %v55
    %v128 = vunpack.c.l.b16 %v56
    %v129 = vunpack.c.h.b16 %v56
    %v130 = vunpack.c.l.b16 %v57
    %v131 = vpack.c.b16 %v128, %v125
    %v132 = vpack.c.b16 %v129, %v126
    %v133 = vpack.c.b16 %v130, %v127
    %vm137 = vcmask 130048
    %v139 = vsel %vm137, %v101, 0
    %v142 = vsel %vm137, %v102, 0
    %v145 = vsel %vm137, %v103, 0
    %v148 = vsel %vm137, %v104, 0
    %150 = vmatprep.subr.bf16.mxu0 0
    %151 = vmatpush1.bf16.msra.mxu0 0
    %152 = vmatprep.subr.bf16.mxu0 0
    %153 = vmatpush1.bf16.msra.mxu0 0
    %154 = vmatprep.subr.bf16.mxu0 0
    %155 = vmatpush1.bf16.msra.mxu0 0
    %156 = vmatprep.subr.bf16.mxu0 0
    %157 = vmatpush1.bf16.msra.mxu0 0
    %158 = vmatprep.subr.bf16.mxu0 0
    %159 = vmatpush1.bf16.msra.mxu0 0
    %160 = vmatprep.subr.bf16.mxu0 0
    %161 = vmatpush1.bf16.msra.mxu0 0
    %162 = vmatprep.subr.bf16.mxu0 0
    %163 = vmatpush1.bf16.msra.mxu0 0
    %164 = vmatprep.subr.bf16.mxu0 %v132
    %165 = vmatpush1.bf16.msra.mxu0 %v131
    %166 = vmatprep.subr.bf16.mxu0 0
    %167 = vmatpush2.bf16.msra.mxu0 0
    %168 = vmatprep.subr.bf16.mxu0 0
    %169 = vmatpush2.bf16.msra.mxu0 0
    %170 = vmatprep.subr.bf16.mxu0 0
    %171 = vmatpush2.bf16.msra.mxu0 0
    %172 = vmatprep.subr.bf16.mxu0 0
    %173 = vmatpush2.bf16.msra.mxu0 0
    %174 = vmatprep.subr.bf16.mxu0 0
    %175 = vmatpush2.bf16.msra.mxu0 0
    %176 = vmatprep.subr.bf16.mxu0 0
    %177 = vmatpush2.bf16.msra.mxu0 0
    %178 = vmatprep.subr.bf16.mxu0 0
    %179 = vmatpush2.bf16.msra.mxu0 0
    %180 = vmatprep.subr.bf16.mxu0 0
    %181 = vmatpush2.bf16.msra.mxu0 0
    %182 = vmatprep.mubr.bf16.mxu0 0
    %183 = vmatmul.mubr.bf16.gmra.mxu0 %v139
    %v184 = vpop.f32.mrf.mxu0
    %v185 = vadd.f32 %v109, %v184
    %v186 = vpop.f32.mrf.mxu0
    %v187 = vadd.f32 %v113, %v186
    %v188 = vpop.f32.mrf.mxu0
    %v189 = vadd.f32 %v109, %v188
    %v190 = vpop.f32.mrf.mxu0
    %v191 = vadd.f32 %v113, %v190
    %192 = vmatprep.mubr.bf16.mxu0 0
    %193 = vmatmul.mubr.bf16.gmra.mxu0 %v142
    %v194 = vpop.f32.mrf.mxu0
    %v195 = vadd.f32 %v109, %v194
    %v196 = vpop.f32.mrf.mxu0
    %v197 = vadd.f32 %v113, %v196
    %v198 = vpop.f32.mrf.mxu0
    %v199 = vadd.f32 %v109, %v198
    %v200 = vpop.f32.mrf.mxu0
    %v201 = vadd.f32 %v113, %v200
    %202 = vmatprep.mubr.bf16.mxu0 0
    %203 = vmatmul.mubr.bf16.gmra.mxu0 %v145
    %v204 = vpop.f32.mrf.mxu0
    %v205 = vadd.f32 %v109, %v204
    %v206 = vpop.f32.mrf.mxu0
    %v207 = vadd.f32 %v113, %v206
    %v208 = vpop.f32.mrf.mxu0
    %v209 = vadd.f32 %v109, %v208
    %v210 = vpop.f32.mrf.mxu0
    %v211 = vadd.f32 %v113, %v210
    %212 = vmatprep.mubr.bf16.mxu0 0
    %213 = vmatmul.mubr.bf16.gmra.mxu0 %v148
    %v214 = vpop.f32.mrf.mxu0
    %v215 = vadd.f32 %v109, %v214
    %v216 = vpop.f32.mrf.mxu0
    %v217 = vadd.f32 %v113, %v216
    %v218 = vpop.f32.mrf.mxu0
    %v219 = vadd.f32 %v109, %v218
    %v220 = vpop.f32.mrf.mxu0
    %v221 = vadd.f32 %v113, %v220
    %222 = vdwg.mxu0
    %223 = vmatprep.subr.bf16.mxu0 0
    %224 = vmatpush1.bf16.msra.mxu0 0
    %225 = vmatprep.subr.bf16.mxu0 0
    %226 = vmatpush1.bf16.msra.mxu0 0
    %227 = vmatprep.subr.bf16.mxu0 0
    %228 = vmatpush1.bf16.msra.mxu0 0
    %229 = vmatprep.subr.bf16.mxu0 0
    %230 = vmatpush1.bf16.msra.mxu0 0
    %231 = vmatprep.subr.bf16.mxu0 0
    %232 = vmatpush1.bf16.msra.mxu0 0
    %233 = vmatprep.subr.bf16.mxu0 0
    %234 = vmatpush1.bf16.msra.mxu0 0
    %235 = vmatprep.subr.bf16.mxu0 0
    %236 = vmatpush1.bf16.msra.mxu0 0
    %237 = vmatprep.subr.bf16.mxu0 0
    %238 = vmatpush1.bf16.msra.mxu0 %v133
    %239 = vmatprep.subr.bf16.mxu0 0
    %240 = vmatpush2.bf16.msra.mxu0 0
    %241 = vmatprep.subr.bf16.mxu0 0
    %242 = vmatpush2.bf16.msra.mxu0 0
    %243 = vmatprep.subr.bf16.mxu0 0
    %244 = vmatpush2.bf16.msra.mxu0 0
    %245 = vmatprep.subr.bf16.mxu0 0
    %246 = vmatpush2.bf16.msra.mxu0 0
    %247 = vmatprep.subr.bf16.mxu0 0
    %248 = vmatpush2.bf16.msra.mxu0 0
    %249 = vmatprep.subr.bf16.mxu0 0
    %250 = vmatpush2.bf16.msra.mxu0 0
    %251 = vmatprep.subr.bf16.mxu0 0
    %252 = vmatpush2.bf16.msra.mxu0 0
    %253 = vmatprep.subr.bf16.mxu0 0
    %254 = vmatpush2.bf16.msra.mxu0 0
    %255 = vmatprep.mubr.bf16.mxu0 0
    %256 = vmatmul.mubr.bf16.gmra.mxu0 %v139
    %v257 = vpop.f32.mrf.mxu0
    %v258 = vadd.f32 %v117, %v257
    %v259 = vpop.f32.mrf.mxu0
    %v260 = vpop.f32.mrf.mxu0
    %v261 = vadd.f32 %v117, %v260
    %v262 = vpop.f32.mrf.mxu0
    %263 = vmatprep.mubr.bf16.mxu0 0
    %264 = vmatmul.mubr.bf16.gmra.mxu0 %v142
    %v265 = vpop.f32.mrf.mxu0
    %v266 = vadd.f32 %v117, %v265
    %v267 = vpop.f32.mrf.mxu0
    %v268 = vpop.f32.mrf.mxu0
    %v269 = vadd.f32 %v117, %v268
    %v270 = vpop.f32.mrf.mxu0
    %271 = vmatprep.mubr.bf16.mxu0 0
    %272 = vmatmul.mubr.bf16.gmra.mxu0 %v145
    %v273 = vpop.f32.mrf.mxu0
    %v274 = vadd.f32 %v117, %v273
    %v275 = vpop.f32.mrf.mxu0
    %v276 = vpop.f32.mrf.mxu0
    %v277 = vadd.f32 %v117, %v276
    %v278 = vpop.f32.mrf.mxu0
    %279 = vmatprep.mubr.bf16.mxu0 0
    %280 = vmatmul.mubr.bf16.gmra.mxu0 %v148
    %v281 = vpop.f32.mrf.mxu0
    %v282 = vadd.f32 %v117, %v281
    %v283 = vpop.f32.mrf.mxu0
    %v284 = vpop.f32.mrf.mxu0
    %v285 = vadd.f32 %v117, %v284
    %v286 = vpop.f32.mrf.mxu0
    %287 = vdwg.mxu0
    %288 = vst [vmem:[#allocation2] sm:$0xff] %v185
    %289 = vst [vmem:[#allocation2 + $0x8] sm:$0xff] %v187
    %290 = vst [vmem:[#allocation2 + $0x10] sm:$0xff] %v258
    %291 = vst [vmem:[#allocation2 + $0x18] sm:$0xff] %v189
    %292 = vst [vmem:[#allocation2 + $0x20] sm:$0xff] %v191
    %293 = vst [vmem:[#allocation2 + $0x28] sm:$0xff] %v261
    %294 = vst [vmem:[#allocation2 + $0x30] sm:$0xff] %v195
    %295 = vst [vmem:[#allocation2 + $0x38] sm:$0xff] %v197
    %296 = vst [vmem:[#allocation2 + $0x40] sm:$0xff] %v266
    %297 = vst [vmem:[#allocation2 + $0x48] sm:$0xff] %v199
    %298 = vst [vmem:[#allocation2 + $0x50] sm:$0xff] %v201
    %299 = vst [vmem:[#allocation2 + $0x58] sm:$0xff] %v269
    %300 = vst [vmem:[#allocation2 + $0x60] sm:$0xff] %v205
    %301 = vst [vmem:[#allocation2 + $0x68] sm:$0xff] %v207
    %302 = vst [vmem:[#allocation2 + $0x70] sm:$0xff] %v274
    %303 = vst [vmem:[#allocation2 + $0x78] sm:$0xff] %v209
    %304 = vst [vmem:[#allocation2 + $0x80] sm:$0xff] %v211
    %305 = vst [vmem:[#allocation2 + $0x88] sm:$0xff] %v277
    %306 = vst [vmem:[#allocation2 + $0x90] sm:$0xff] %v215
    %307 = vst [vmem:[#allocation2 + $0x98] sm:$0xff] %v217
    %308 = vst [vmem:[#allocation2 + $0xa0] sm:$0xff] %v282
    %309 = vst [vmem:[#allocation2 + $0xa8] sm:$0xff] %v219
    %310 = vst [vmem:[#allocation2 + $0xb0] sm:$0xff] %v221
    %311 = vst [vmem:[#allocation2 + $0xb8] sm:$0xff] %v285
    %v312 = vld [vmem:[#allocation2] sm:$0xff]
    %v313 = vld [vmem:[#allocation2 + $0x8] sm:$0xff]
    %v314 = vld [vmem:[#allocation2 + $0x10] sm:$0xff]
    %v347 = vunpack.c.l.b16 %v62
    %v348 = vunpack.c.h.b16 %v62
    %v349 = vunpack.c.l.b16 %v63
    %v350 = vunpack.c.l.b16 %v64
    %v351 = vunpack.c.h.b16 %v64
    %v352 = vunpack.c.l.b16 %v65
    %v353 = vunpack.c.l.b16 %v66
    %v354 = vunpack.c.h.b16 %v66
    %v355 = vunpack.c.l.b16 %v67
    %v356 = vunpack.c.l.b16 %v68
    %v357 = vunpack.c.h.b16 %v68
    %v358 = vunpack.c.l.b16 %v69
    %v359 = vunpack.c.l.b16 %v70
    %v360 = vunpack.c.h.b16 %v70
    %v361 = vunpack.c.l.b16 %v71
    %v362 = vunpack.c.l.b16 %v72
    %v363 = vunpack.c.h.b16 %v72
    %v364 = vunpack.c.l.b16 %v73
    %v365 = vunpack.c.l.b16 %v74
    %v366 = vunpack.c.h.b16 %v74
    %v367 = vunpack.c.l.b16 %v75
    %v368 = vunpack.c.l.b16 %v76
    %v369 = vunpack.c.h.b16 %v76
    %v370 = vunpack.c.l.b16 %v77
    %v371 = vunpack.c.l.b16 %v78
    %v372 = vunpack.c.h.b16 %v78
    %v373 = vunpack.c.l.b16 %v79
    %v374 = vunpack.c.l.b16 %v80
    %v375 = vunpack.c.h.b16 %v80
    %v376 = vunpack.c.l.b16 %v81
    %v377 = vunpack.c.l.b16 %v82
    %v378 = vunpack.c.h.b16 %v82
    %v379 = vunpack.c.l.b16 %v83
    %v380 = vunpack.c.l.b16 %v84
    %v381 = vunpack.c.h.b16 %v84
    %v382 = vunpack.c.l.b16 %v85
    %v383 = vunpack.c.l.b16 %v86
    %v384 = vunpack.c.h.b16 %v86
    %v385 = vunpack.c.l.b16 %v87
    %v386 = vunpack.c.l.b16 %v88
    %v387 = vunpack.c.h.b16 %v88
    %v388 = vunpack.c.l.b16 %v89
    %v389 = vunpack.c.l.b16 %v90
    %v390 = vunpack.c.h.b16 %v90
    %v391 = vunpack.c.l.b16 %v91
    %v392 = vunpack.c.l.b16 %v92
    %v393 = vunpack.c.h.b16 %v92
    %v394 = vunpack.c.l.b16 %v93
    %v395 = vpack.c.b16 %v350, %v347
    %v396 = vpack.c.b16 %v351, %v348
    %v397 = vpack.c.b16 %v352, %v349
    %v398 = vpack.c.b16 %v356, %v353
    %v399 = vpack.c.b16 %v357, %v354
    %v400 = vpack.c.b16 %v358, %v355
    %v401 = vpack.c.b16 %v362, %v359
    %v402 = vpack.c.b16 %v363, %v360
    %v403 = vpack.c.b16 %v364, %v361
    %v404 = vpack.c.b16 %v368, %v365
    %v405 = vpack.c.b16 %v369, %v366
    %v406 = vpack.c.b16 %v370, %v367
    %v407 = vpack.c.b16 %v374, %v371
    %v408 = vpack.c.b16 %v375, %v372
    %v409 = vpack.c.b16 %v376, %v373
    %v410 = vpack.c.b16 %v380, %v377
    %v411 = vpack.c.b16 %v381, %v378
    %v412 = vpack.c.b16 %v382, %v379
    %v413 = vpack.c.b16 %v386, %v383
    %v414 = vpack.c.b16 %v387, %v384
    %v415 = vpack.c.b16 %v388, %v385
    %v416 = vpack.c.b16 %v392, %v389
    %v417 = vpack.c.b16 %v393, %v390
    %v418 = vpack.c.b16 %v394, %v391
    %443 = vmatprep.subr.bf16.mxu0 %v417
    %444 = vmatpush1.bf16.msra.mxu0 %v416
    %445 = vmatprep.subr.bf16.mxu0 %v414
    %446 = vmatpush1.bf16.msra.mxu0 %v413
    %447 = vmatprep.subr.bf16.mxu0 %v411
    %448 = vmatpush1.bf16.msra.mxu0 %v410
    %449 = vmatprep.subr.bf16.mxu0 %v408
    %450 = vmatpush1.bf16.msra.mxu0 %v407
    %451 = vmatprep.subr.bf16.mxu0 %v405
    %452 = vmatpush1.bf16.msra.mxu0 %v404
    %453 = vmatprep.subr.bf16.mxu0 %v402
    %454 = vmatpush1.bf16.msra.mxu0 %v401
    %455 = vmatprep.subr.bf16.mxu0 %v399
    %456 = vmatpush1.bf16.msra.mxu0 %v398
    %457 = vmatprep.subr.bf16.mxu0 %v396
    %458 = vmatpush1.bf16.msra.mxu0 %v395
    %459 = vmatprep.subr.bf16.mxu0 0
    %460 = vmatpush2.bf16.msra.mxu0 0
    %461 = vmatprep.subr.bf16.mxu0 0
    %462 = vmatpush2.bf16.msra.mxu0 0
    %463 = vmatprep.subr.bf16.mxu0 0
    %464 = vmatpush2.bf16.msra.mxu0 0
    %465 = vmatprep.subr.bf16.mxu0 0
    %466 = vmatpush2.bf16.msra.mxu0 0
    %467 = vmatprep.subr.bf16.mxu0 0
    %468 = vmatpush2.bf16.msra.mxu0 0
    %469 = vmatprep.subr.bf16.mxu0 0
    %470 = vmatpush2.bf16.msra.mxu0 0
    %471 = vmatprep.subr.bf16.mxu0 0
    %472 = vmatpush2.bf16.msra.mxu0 0
    %473 = vmatprep.subr.bf16.mxu0 0
    %474 = vmatpush2.bf16.msra.mxu0 0
    %475 = vmatprep.mubr.bf16.mxu0 0
    %476 = vmatmul.mubr.bf16.gmra.mxu0 0
    %v477 = vpop.f32.mrf.mxu0
    %v478 = vadd.f32 0.0, %v477
    %v479 = vpop.f32.mrf.mxu0
    %v480 = vadd.f32 0.0, %v479
    %v481 = vpop.f32.mrf.mxu0
    %v482 = vpop.f32.mrf.mxu0
    %483 = vdwg.mxu0
    %484 = vmatprep.subr.bf16.mxu0 0
    %485 = vmatpush1.bf16.msra.mxu0 %v418
    %486 = vmatprep.subr.bf16.mxu0 0
    %487 = vmatpush1.bf16.msra.mxu0 %v415
    %488 = vmatprep.subr.bf16.mxu0 0
    %489 = vmatpush1.bf16.msra.mxu0 %v412
    %490 = vmatprep.subr.bf16.mxu0 0
    %491 = vmatpush1.bf16.msra.mxu0 %v409
    %492 = vmatprep.subr.bf16.mxu0 0
    %493 = vmatpush1.bf16.msra.mxu0 %v406
    %494 = vmatprep.subr.bf16.mxu0 0
    %495 = vmatpush1.bf16.msra.mxu0 %v403
    %496 = vmatprep.subr.bf16.mxu0 0
    %497 = vmatpush1.bf16.msra.mxu0 %v400
    %498 = vmatprep.subr.bf16.mxu0 0
    %499 = vmatpush1.bf16.msra.mxu0 %v397
    %500 = vmatprep.subr.bf16.mxu0 0
    %501 = vmatpush2.bf16.msra.mxu0 0
    %502 = vmatprep.subr.bf16.mxu0 0
    %503 = vmatpush2.bf16.msra.mxu0 0
    %504 = vmatprep.subr.bf16.mxu0 0
    %505 = vmatpush2.bf16.msra.mxu0 0
    %506 = vmatprep.subr.bf16.mxu0 0
    %507 = vmatpush2.bf16.msra.mxu0 0
    %508 = vmatprep.subr.bf16.mxu0 0
    %509 = vmatpush2.bf16.msra.mxu0 0
    %510 = vmatprep.subr.bf16.mxu0 0
    %511 = vmatpush2.bf16.msra.mxu0 0
    %512 = vmatprep.subr.bf16.mxu0 0
    %513 = vmatpush2.bf16.msra.mxu0 0
    %514 = vmatprep.subr.bf16.mxu0 0
    %515 = vmatpush2.bf16.msra.mxu0 0
    %516 = vmatprep.mubr.bf16.mxu0 0
    %517 = vmatmul.mubr.bf16.gmra.mxu0 0
    %v518 = vpop.f32.mrf.mxu0
    %v519 = vadd.f32 0.0, %v518
    %v520 = vpop.f32.mrf.mxu0
    %v521 = vpop.f32.mrf.mxu0
    %v522 = vpop.f32.mrf.mxu0
    %523 = vdwg.mxu0
    %v524 = vadd.f32 %v312, %v478
    %v525 = vxor.u32 %v524, 2147483648
    %v526 = vmul.f32 %v525, 1.442695
    %v527 = vpow.pop %v526
    %v528 = vadd.f32 %v527, 1.0
    %v529 = vrcp.pop %v528
    %v530 = vmul.f32 1.0, %v529
    %v531 = vadd.f32 %v480, %v97
    %v532 = vmul.f32 %v530, %v531
    %v533 = vadd.f32 %v313, %v532
    %v534 = vtanh.pop %v533
    %v535 = vadd.f32 %v314, %v519
    %v536 = vxor.u32 %v535, 2147483648
    %v537 = vmul.f32 %v536, 1.442695
    %v538 = vpow.pop %v537
    %v539 = vadd.f32 %v538, 1.0
    %v540 = vrcp.pop %v539
    %v541 = vmul.f32 1.0, %v540
    %v542 = vsub.f32 1.0, %v541
    %v543 = vmul.f32 %v542, %v534
    %v544 = vmul.f32 %v541, 0.0
    %v545 = vadd.f32 %v543, %v544
    %v546 = vld [vmem:[#allocation2 + $0x18] sm:$0xff]
    %v547 = vld [vmem:[#allocation2 + $0x20] sm:$0xff]
    %v548 = vld [vmem:[#allocation2 + $0x28] sm:$0xff]
    %v549 = vpack.c.bf16 %v545, %v545
    %550 = vmatprep.subr.bf16.mxu0 %v417
    %551 = vmatpush1.bf16.msra.mxu0 %v416
    %552 = vmatprep.subr.bf16.mxu0 %v414
    %553 = vmatpush1.bf16.msra.mxu0 %v413
    %554 = vmatprep.subr.bf16.mxu0 %v411
    %555 = vmatpush1.bf16.msra.mxu0 %v410
    %556 = vmatprep.subr.bf16.mxu0 %v408
    %557 = vmatpush1.bf16.msra.mxu0 %v407
    %558 = vmatprep.subr.bf16.mxu0 %v405
    %559 = vmatpush1.bf16.msra.mxu0 %v404
    %560 = vmatprep.subr.bf16.mxu0 %v402
    %561 = vmatpush1.bf16.msra.mxu0 %v401
    %562 = vmatprep.subr.bf16.mxu0 %v399
    %563 = vmatpush1.bf16.msra.mxu0 %v398
    %564 = vmatprep.subr.bf16.mxu0 %v396
    %565 = vmatpush1.bf16.msra.mxu0 %v395
    %566 = vmatprep.subr.bf16.mxu0 0
    %567 = vmatpush2.bf16.msra.mxu0 0
    %568 = vmatprep.subr.bf16.mxu0 0
    %569 = vmatpush2.bf16.msra.mxu0 0
    %570 = vmatprep.subr.bf16.mxu0 0
    %571 = vmatpush2.bf16.msra.mxu0 0
    %572 = vmatprep.subr.bf16.mxu0 0
    %573 = vmatpush2.bf16.msra.mxu0 0
    %574 = vmatprep.subr.bf16.mxu0 0
    %575 = vmatpush2.bf16.msra.mxu0 0
    %576 = vmatprep.subr.bf16.mxu0 0
    %577 = vmatpush2.bf16.msra.mxu0 0
    %578 = vmatprep.subr.bf16.mxu0 0
    %579 = vmatpush2.bf16.msra.mxu0 0
    %580 = vmatprep.subr.bf16.mxu0 0
    %581 = vmatpush2.bf16.msra.mxu0 0
    %582 = vmatprep.mubr.bf16.mxu0 0
    %583 = vmatmul.mubr.bf16.gmra.mxu0 %v549
    %v584 = vpop.f32.mrf.mxu0
    %v585 = vadd.f32 0.0, %v584
    %v586 = vpop.f32.mrf.mxu0
    %v587 = vadd.f32 0.0, %v586
    %v588 = vpop.f32.mrf.mxu0
    %v589 = vpop.f32.mrf.mxu0
    %590 = vdwg.mxu0
    %591 = vmatprep.subr.bf16.mxu0 0
    %592 = vmatpush1.bf16.msra.mxu0 %v418
    %593 = vmatprep.subr.bf16.mxu0 0
    %594 = vmatpush1.bf16.msra.mxu0 %v415
    %595 = vmatprep.subr.bf16.mxu0 0
    %596 = vmatpush1.bf16.msra.mxu0 %v412
    %597 = vmatprep.subr.bf16.mxu0 0
    %598 = vmatpush1.bf16.msra.mxu0 %v409
    %599 = vmatprep.subr.bf16.mxu0 0
    %600 = vmatpush1.bf16.msra.mxu0 %v406
    %601 = vmatprep.subr.bf16.mxu0 0
    %602 = vmatpush1.bf16.msra.mxu0 %v403
    %603 = vmatprep.subr.bf16.mxu0 0
    %604 = vmatpush1.bf16.msra.mxu0 %v400
    %605 = vmatprep.subr.bf16.mxu0 0
    %606 = vmatpush1.bf16.msra.mxu0 %v397
    %607 = vmatprep.subr.bf16.mxu0 0
    %608 = vmatpush2.bf16.msra.mxu0 0
    %609 = vmatprep.subr.bf16.mxu0 0
    %610 = vmatpush2.bf16.msra.mxu0 0
    %611 = vmatprep.subr.bf16.mxu0 0
    %612 = vmatpush2.bf16.msra.mxu0 0
    %613 = vmatprep.subr.bf16.mxu0 0
    %614 = vmatpush2.bf16.msra.mxu0 0
    %615 = vmatprep.subr.bf16.mxu0 0
    %616 = vmatpush2.bf16.msra.mxu0 0
    %617 = vmatprep.subr.bf16.mxu0 0
    %618 = vmatpush2.bf16.msra.mxu0 0
    %619 = vmatprep.subr.bf16.mxu0 0
    %620 = vmatpush2.bf16.msra.mxu0 0
    %621 = vmatprep.subr.bf16.mxu0 0
    %622 = vmatpush2.bf16.msra.mxu0 0
    %623 = vmatprep.mubr.bf16.mxu0 0
    %624 = vmatmul.mubr.bf16.gmra.mxu0 %v549
    %v625 = vpop.f32.mrf.mxu0
    %v626 = vadd.f32 0.0, %v625
    %v627 = vpop.f32.mrf.mxu0
    %v628 = vpop.f32.mrf.mxu0
    %v629 = vpop.f32.mrf.mxu0
    %630 = vdwg.mxu0
    %v631 = vadd.f32 %v546, %v585
    %v632 = vxor.u32 %v631, 2147483648
    %v633 = vmul.f32 %v632, 1.442695
    %v634 = vpow.pop %v633
    %v635 = vadd.f32 %v634, 1.0
    %v636 = vrcp.pop %v635
    %v637 = vmul.f32 1.0, %v636
    %v638 = vadd.f32 %v587, %v97
    %v639 = vmul.f32 %v637, %v638
    %v640 = vadd.f32 %v547, %v639
    %v641 = vtanh.pop %v640
    %v642 = vadd.f32 %v548, %v626
    %v643 = vxor.u32 %v642, 2147483648
    %v644 = vmul.f32 %v643, 1.442695
    %v645 = vpow.pop %v644
    %v646 = vadd.f32 %v645, 1.0
    %v647 = vrcp.pop %v646
    %v648 = vmul.f32 1.0, %v647
    %v649 = vsub.f32 1.0, %v648
    %v650 = vmul.f32 %v649, %v641
    %v651 = vmul.f32 %v648, %v545
    %v652 = vadd.f32 %v650, %v651
    %v653 = vld [vmem:[#allocation2 + $0x30] sm:$0xff]
    %v654 = vld [vmem:[#allocation2 + $0x38] sm:$0xff]
    %v655 = vld [vmem:[#allocation2 + $0x40] sm:$0xff]
    %v656 = vpack.c.bf16 %v652, %v652
    %657 = vmatprep.subr.bf16.mxu0 %v417
    %658 = vmatpush1.bf16.msra.mxu0 %v416
    %659 = vmatprep.subr.bf16.mxu0 %v414
    %660 = vmatpush1.bf16.msra.mxu0 %v413
    %661 = vmatprep.subr.bf16.mxu0 %v411
    %662 = vmatpush1.bf16.msra.mxu0 %v410
    %663 = vmatprep.subr.bf16.mxu0 %v408
    %664 = vmatpush1.bf16.msra.mxu0 %v407
    %665 = vmatprep.subr.bf16.mxu0 %v405
    %666 = vmatpush1.bf16.msra.mxu0 %v404
    %667 = vmatprep.subr.bf16.mxu0 %v402
    %668 = vmatpush1.bf16.msra.mxu0 %v401
    %669 = vmatprep.subr.bf16.mxu0 %v399
    %670 = vmatpush1.bf16.msra.mxu0 %v398
    %671 = vmatprep.subr.bf16.mxu0 %v396
    %672 = vmatpush1.bf16.msra.mxu0 %v395
    %673 = vmatprep.subr.bf16.mxu0 0
    %674 = vmatpush2.bf16.msra.mxu0 0
    %675 = vmatprep.subr.bf16.mxu0 0
    %676 = vmatpush2.bf16.msra.mxu0 0
    %677 = vmatprep.subr.bf16.mxu0 0
    %678 = vmatpush2.bf16.msra.mxu0 0
    %679 = vmatprep.subr.bf16.mxu0 0
    %680 = vmatpush2.bf16.msra.mxu0 0
    %681 = vmatprep.subr.bf16.mxu0 0
    %682 = vmatpush2.bf16.msra.mxu0 0
    %683 = vmatprep.subr.bf16.mxu0 0
    %684 = vmatpush2.bf16.msra.mxu0 0
    %685 = vmatprep.subr.bf16.mxu0 0
    %686 = vmatpush2.bf16.msra.mxu0 0
    %687 = vmatprep.subr.bf16.mxu0 0
    %688 = vmatpush2.bf16.msra.mxu0 0
    %689 = vmatprep.mubr.bf16.mxu0 0
    %690 = vmatmul.mubr.bf16.gmra.mxu0 %v656
    %v691 = vpop.f32.mrf.mxu0
    %v692 = vadd.f32 0.0, %v691
    %v693 = vpop.f32.mrf.mxu0
    %v694 = vadd.f32 0.0, %v693
    %v695 = vpop.f32.mrf.mxu0
    %v696 = vpop.f32.mrf.mxu0
    %697 = vdwg.mxu0
    %698 = vmatprep.subr.bf16.mxu0 0
    %699 = vmatpush1.bf16.msra.mxu0 %v418
    %700 = vmatprep.subr.bf16.mxu0 0
    %701 = vmatpush1.bf16.msra.mxu0 %v415
    %702 = vmatprep.subr.bf16.mxu0 0
    %703 = vmatpush1.bf16.msra.mxu0 %v412
    %704 = vmatprep.subr.bf16.mxu0 0
    %705 = vmatpush1.bf16.msra.mxu0 %v409
    %706 = vmatprep.subr.bf16.mxu0 0
    %707 = vmatpush1.bf16.msra.mxu0 %v406
    %708 = vmatprep.subr.bf16.mxu0 0
    %709 = vmatpush1.bf16.msra.mxu0 %v403
    %710 = vmatprep.subr.bf16.mxu0 0
    %711 = vmatpush1.bf16.msra.mxu0 %v400
    %712 = vmatprep.subr.bf16.mxu0 0
    %713 = vmatpush1.bf16.msra.mxu0 %v397
    %714 = vmatprep.subr.bf16.mxu0 0
    %715 = vmatpush2.bf16.msra.mxu0 0
    %716 = vmatprep.subr.bf16.mxu0 0
    %717 = vmatpush2.bf16.msra.mxu0 0
    %718 = vmatprep.subr.bf16.mxu0 0
    %719 = vmatpush2.bf16.msra.mxu0 0
    %720 = vmatprep.subr.bf16.mxu0 0
    %721 = vmatpush2.bf16.msra.mxu0 0
    %722 = vmatprep.subr.bf16.mxu0 0
    %723 = vmatpush2.bf16.msra.mxu0 0
    %724 = vmatprep.subr.bf16.mxu0 0
    %725 = vmatpush2.bf16.msra.mxu0 0
    %726 = vmatprep.subr.bf16.mxu0 0
    %727 = vmatpush2.bf16.msra.mxu0 0
    %728 = vmatprep.subr.bf16.mxu0 0
    %729 = vmatpush2.bf16.msra.mxu0 0
    %730 = vmatprep.mubr.bf16.mxu0 0
    %731 = vmatmul.mubr.bf16.gmra.mxu0 %v656
    %v732 = vpop.f32.mrf.mxu0
    %v733 = vadd.f32 0.0, %v732
    %v734 = vpop.f32.mrf.mxu0
    %v735 = vpop.f32.mrf.mxu0
    %v736 = vpop.f32.mrf.mxu0
    %737 = vdwg.mxu0
    %v738 = vadd.f32 %v653, %v692
    %v739 = vxor.u32 %v738, 2147483648
    %v740 = vmul.f32 %v739, 1.442695
    %v741 = vpow.pop %v740
    %v742 = vadd.f32 %v741, 1.0
    %v743 = vrcp.pop %v742
    %v744 = vmul.f32 1.0, %v743
    %v745 = vadd.f32 %v694, %v97
    %v746 = vmul.f32 %v744, %v745
    %v747 = vadd.f32 %v654, %v746
    %v748 = vtanh.pop %v747
    %v749 = vadd.f32 %v655, %v733
    %v750 = vxor.u32 %v749, 2147483648
    %v751 = vmul.f32 %v750, 1.442695
    %v752 = vpow.pop %v751
    %v753 = vadd.f32 %v752, 1.0
    %v754 = vrcp.pop %v753
    %v755 = vmul.f32 1.0, %v754
    %v756 = vsub.f32 1.0, %v755
    %v757 = vmul.f32 %v756, %v748
    %v758 = vmul.f32 %v755, %v652
    %v759 = vadd.f32 %v757, %v758
    %v760 = vld [vmem:[#allocation2 + $0x48] sm:$0xff]
    %v761 = vld [vmem:[#allocation2 + $0x50] sm:$0xff]
    %v762 = vld [vmem:[#allocation2 + $0x58] sm:$0xff]
    %v763 = vpack.c.bf16 %v759, %v759
    %764 = vmatprep.subr.bf16.mxu0 %v417
    %765 = vmatpush1.bf16.msra.mxu0 %v416
    %766 = vmatprep.subr.bf16.mxu0 %v414
    %767 = vmatpush1.bf16.msra.mxu0 %v413
    %768 = vmatprep.subr.bf16.mxu0 %v411
    %769 = vmatpush1.bf16.msra.mxu0 %v410
    %770 = vmatprep.subr.bf16.mxu0 %v408
    %771 = vmatpush1.bf16.msra.mxu0 %v407
    %772 = vmatprep.subr.bf16.mxu0 %v405
    %773 = vmatpush1.bf16.msra.mxu0 %v404
    %774 = vmatprep.subr.bf16.mxu0 %v402
    %775 = vmatpush1.bf16.msra.mxu0 %v401
    %776 = vmatprep.subr.bf16.mxu0 %v399
    %777 = vmatpush1.bf16.msra.mxu0 %v398
    %778 = vmatprep.subr.bf16.mxu0 %v396
    %779 = vmatpush1.bf16.msra.mxu0 %v395
    %780 = vmatprep.subr.bf16.mxu0 0
    %781 = vmatpush2.bf16.msra.mxu0 0
    %782 = vmatprep.subr.bf16.mxu0 0
    %783 = vmatpush2.bf16.msra.mxu0 0
    %784 = vmatprep.subr.bf16.mxu0 0
    %785 = vmatpush2.bf16.msra.mxu0 0
    %786 = vmatprep.subr.bf16.mxu0 0
    %787 = vmatpush2.bf16.msra.mxu0 0
    %788 = vmatprep.subr.bf16.mxu0 0
    %789 = vmatpush2.bf16.msra.mxu0 0
    %790 = vmatprep.subr.bf16.mxu0 0
    %791 = vmatpush2.bf16.msra.mxu0 0
    %792 = vmatprep.subr.bf16.mxu0 0
    %793 = vmatpush2.bf16.msra.mxu0 0
    %794 = vmatprep.subr.bf16.mxu0 0
    %795 = vmatpush2.bf16.msra.mxu0 0
    %796 = vmatprep.mubr.bf16.mxu0 0
    %797 = vmatmul.mubr.bf16.gmra.mxu0 %v763
    %v798 = vpop.f32.mrf.mxu0
    %v799 = vadd.f32 0.0, %v798
    %v800 = vpop.f32.mrf.mxu0
    %v801 = vadd.f32 0.0, %v800
    %v802 = vpop.f32.mrf.mxu0
    %v803 = vpop.f32.mrf.mxu0
    %804 = vdwg.mxu0
    %805 = vmatprep.subr.bf16.mxu0 0
    %806 = vmatpush1.bf16.msra.mxu0 %v418
    %807 = vmatprep.subr.bf16.mxu0 0
    %808 = vmatpush1.bf16.msra.mxu0 %v415
    %809 = vmatprep.subr.bf16.mxu0 0
    %810 = vmatpush1.bf16.msra.mxu0 %v412
    %811 = vmatprep.subr.bf16.mxu0 0
    %812 = vmatpush1.bf16.msra.mxu0 %v409
    %813 = vmatprep.subr.bf16.mxu0 0
    %814 = vmatpush1.bf16.msra.mxu0 %v406
    %815 = vmatprep.subr.bf16.mxu0 0
    %816 = vmatpush1.bf16.msra.mxu0 %v403
    %817 = vmatprep.subr.bf16.mxu0 0
    %818 = vmatpush1.bf16.msra.mxu0 %v400
    %819 = vmatprep.subr.bf16.mxu0 0
    %820 = vmatpush1.bf16.msra.mxu0 %v397
    %821 = vmatprep.subr.bf16.mxu0 0
    %822 = vmatpush2.bf16.msra.mxu0 0
    %823 = vmatprep.subr.bf16.mxu0 0
    %824 = vmatpush2.bf16.msra.mxu0 0
    %825 = vmatprep.subr.bf16.mxu0 0
    %826 = vmatpush2.bf16.msra.mxu0 0
    %827 = vmatprep.subr.bf16.mxu0 0
    %828 = vmatpush2.bf16.msra.mxu0 0
    %829 = vmatprep.subr.bf16.mxu0 0
    %830 = vmatpush2.bf16.msra.mxu0 0
    %831 = vmatprep.subr.bf16.mxu0 0
    %832 = vmatpush2.bf16.msra.mxu0 0
    %833 = vmatprep.subr.bf16.mxu0 0
    %834 = vmatpush2.bf16.msra.mxu0 0
    %835 = vmatprep.subr.bf16.mxu0 0
    %836 = vmatpush2.bf16.msra.mxu0 0
    %837 = vmatprep.mubr.bf16.mxu0 0
    %838 = vmatmul.mubr.bf16.gmra.mxu0 %v763
    %v839 = vpop.f32.mrf.mxu0
    %v840 = vadd.f32 0.0, %v839
    %v841 = vpop.f32.mrf.mxu0
    %v842 = vpop.f32.mrf.mxu0
    %v843 = vpop.f32.mrf.mxu0
    %844 = vdwg.mxu0
    %v845 = vadd.f32 %v760, %v799
    %v846 = vxor.u32 %v845, 2147483648
    %v847 = vmul.f32 %v846, 1.442695
    %v848 = vpow.pop %v847
    %v849 = vadd.f32 %v848, 1.0
    %v850 = vrcp.pop %v849
    %v851 = vmul.f32 1.0, %v850
    %v852 = vadd.f32 %v801, %v97
    %v853 = vmul.f32 %v851, %v852
    %v854 = vadd.f32 %v761, %v853
    %v855 = vtanh.pop %v854
    %v856 = vadd.f32 %v762, %v840
    %v857 = vxor.u32 %v856, 2147483648
    %v858 = vmul.f32 %v857, 1.442695
    %v859 = vpow.pop %v858
    %v860 = vadd.f32 %v859, 1.0
    %v861 = vrcp.pop %v860
    %v862 = vmul.f32 1.0, %v861
    %v863 = vsub.f32 1.0, %v862
    %v864 = vmul.f32 %v863, %v855
    %v865 = vmul.f32 %v862, %v759
    %v866 = vadd.f32 %v864, %v865
    %v867 = vld [vmem:[#allocation2 + $0x60] sm:$0xff]
    %v868 = vld [vmem:[#allocation2 + $0x68] sm:$0xff]
    %v869 = vld [vmem:[#allocation2 + $0x70] sm:$0xff]
    %v870 = vpack.c.bf16 %v866, %v866
    %871 = vmatprep.subr.bf16.mxu0 %v417
    %872 = vmatpush1.bf16.msra.mxu0 %v416
    %873 = vmatprep.subr.bf16.mxu0 %v414
    %874 = vmatpush1.bf16.msra.mxu0 %v413
    %875 = vmatprep.subr.bf16.mxu0 %v411
    %876 = vmatpush1.bf16.msra.mxu0 %v410
    %877 = vmatprep.subr.bf16.mxu0 %v408
    %878 = vmatpush1.bf16.msra.mxu0 %v407
    %879 = vmatprep.subr.bf16.mxu0 %v405
    %880 = vmatpush1.bf16.msra.mxu0 %v404
    %881 = vmatprep.subr.bf16.mxu0 %v402
    %882 = vmatpush1.bf16.msra.mxu0 %v401
    %883 = vmatprep.subr.bf16.mxu0 %v399
    %884 = vmatpush1.bf16.msra.mxu0 %v398
    %885 = vmatprep.subr.bf16.mxu0 %v396
    %886 = vmatpush1.bf16.msra.mxu0 %v395
    %887 = vmatprep.subr.bf16.mxu0 0
    %888 = vmatpush2.bf16.msra.mxu0 0
    %889 = vmatprep.subr.bf16.mxu0 0
    %890 = vmatpush2.bf16.msra.mxu0 0
    %891 = vmatprep.subr.bf16.mxu0 0
    %892 = vmatpush2.bf16.msra.mxu0 0
    %893 = vmatprep.subr.bf16.mxu0 0
    %894 = vmatpush2.bf16.msra.mxu0 0
    %895 = vmatprep.subr.bf16.mxu0 0
    %896 = vmatpush2.bf16.msra.mxu0 0
    %897 = vmatprep.subr.bf16.mxu0 0
    %898 = vmatpush2.bf16.msra.mxu0 0
    %899 = vmatprep.subr.bf16.mxu0 0
    %900 = vmatpush2.bf16.msra.mxu0 0
    %901 = vmatprep.subr.bf16.mxu0 0
    %902 = vmatpush2.bf16.msra.mxu0 0
    %903 = vmatprep.mubr.bf16.mxu0 0
    %904 = vmatmul.mubr.bf16.gmra.mxu0 %v870
    %v905 = vpop.f32.mrf.mxu0
    %v906 = vadd.f32 0.0, %v905
    %v907 = vpop.f32.mrf.mxu0
    %v908 = vadd.f32 0.0, %v907
    %v909 = vpop.f32.mrf.mxu0
    %v910 = vpop.f32.mrf.mxu0
    %911 = vdwg.mxu0
    %912 = vmatprep.subr.bf16.mxu0 0
    %913 = vmatpush1.bf16.msra.mxu0 %v418
    %914 = vmatprep.subr.bf16.mxu0 0
    %915 = vmatpush1.bf16.msra.mxu0 %v415
    %916 = vmatprep.subr.bf16.mxu0 0
    %917 = vmatpush1.bf16.msra.mxu0 %v412
    %918 = vmatprep.subr.bf16.mxu0 0
    %919 = vmatpush1.bf16.msra.mxu0 %v409
    %920 = vmatprep.subr.bf16.mxu0 0
    %921 = vmatpush1.bf16.msra.mxu0 %v406
    %922 = vmatprep.subr.bf16.mxu0 0
    %923 = vmatpush1.bf16.msra.mxu0 %v403
    %924 = vmatprep.subr.bf16.mxu0 0
    %925 = vmatpush1.bf16.msra.mxu0 %v400
    %926 = vmatprep.subr.bf16.mxu0 0
    %927 = vmatpush1.bf16.msra.mxu0 %v397
    %928 = vmatprep.subr.bf16.mxu0 0
    %929 = vmatpush2.bf16.msra.mxu0 0
    %930 = vmatprep.subr.bf16.mxu0 0
    %931 = vmatpush2.bf16.msra.mxu0 0
    %932 = vmatprep.subr.bf16.mxu0 0
    %933 = vmatpush2.bf16.msra.mxu0 0
    %934 = vmatprep.subr.bf16.mxu0 0
    %935 = vmatpush2.bf16.msra.mxu0 0
    %936 = vmatprep.subr.bf16.mxu0 0
    %937 = vmatpush2.bf16.msra.mxu0 0
    %938 = vmatprep.subr.bf16.mxu0 0
    %939 = vmatpush2.bf16.msra.mxu0 0
    %940 = vmatprep.subr.bf16.mxu0 0
    %941 = vmatpush2.bf16.msra.mxu0 0
    %942 = vmatprep.subr.bf16.mxu0 0
    %943 = vmatpush2.bf16.msra.mxu0 0
    %944 = vmatprep.mubr.bf16.mxu0 0
    %945 = vmatmul.mubr.bf16.gmra.mxu0 %v870
    %v946 = vpop.f32.mrf.mxu0
    %v947 = vadd.f32 0.0, %v946
    %v948 = vpop.f32.mrf.mxu0
    %v949 = vpop.f32.mrf.mxu0
    %v950 = vpop.f32.mrf.mxu0
    %951 = vdwg.mxu0
    %v952 = vadd.f32 %v867, %v906
    %v953 = vxor.u32 %v952, 2147483648
    %v954 = vmul.f32 %v953, 1.442695
    %v955 = vpow.pop %v954
    %v956 = vadd.f32 %v955, 1.0
    %v957 = vrcp.pop %v956
    %v958 = vmul.f32 1.0, %v957
    %v959 = vadd.f32 %v908, %v97
    %v960 = vmul.f32 %v958, %v959
    %v961 = vadd.f32 %v868, %v960
    %v962 = vtanh.pop %v961
    %v963 = vadd.f32 %v869, %v947
    %v964 = vxor.u32 %v963, 2147483648
    %v965 = vmul.f32 %v964, 1.442695
    %v966 = vpow.pop %v965
    %v967 = vadd.f32 %v966, 1.0
    %v968 = vrcp.pop %v967
    %v969 = vmul.f32 1.0, %v968
    %v970 = vsub.f32 1.0, %v969
    %v971 = vmul.f32 %v970, %v962
    %v972 = vmul.f32 %v969, %v866
    %v973 = vadd.f32 %v971, %v972
    %v974 = vld [vmem:[#allocation2 + $0x78] sm:$0xff]
    %v975 = vld [vmem:[#allocation2 + $0x80] sm:$0xff]
    %v976 = vld [vmem:[#allocation2 + $0x88] sm:$0xff]
    %v977 = vpack.c.bf16 %v973, %v973
    %978 = vmatprep.subr.bf16.mxu0 %v417
    %979 = vmatpush1.bf16.msra.mxu0 %v416
    %980 = vmatprep.subr.bf16.mxu0 %v414
    %981 = vmatpush1.bf16.msra.mxu0 %v413
    %982 = vmatprep.subr.bf16.mxu0 %v411
    %983 = vmatpush1.bf16.msra.mxu0 %v410
    %984 = vmatprep.subr.bf16.mxu0 %v408
    %985 = vmatpush1.bf16.msra.mxu0 %v407
    %986 = vmatprep.subr.bf16.mxu0 %v405
    %987 = vmatpush1.bf16.msra.mxu0 %v404
    %988 = vmatprep.subr.bf16.mxu0 %v402
    %989 = vmatpush1.bf16.msra.mxu0 %v401
    %990 = vmatprep.subr.bf16.mxu0 %v399
    %991 = vmatpush1.bf16.msra.mxu0 %v398
    %992 = vmatprep.subr.bf16.mxu0 %v396
    %993 = vmatpush1.bf16.msra.mxu0 %v395
    %994 = vmatprep.subr.bf16.mxu0 0
    %995 = vmatpush2.bf16.msra.mxu0 0
    %996 = vmatprep.subr.bf16.mxu0 0
    %997 = vmatpush2.bf16.msra.mxu0 0
    %998 = vmatprep.subr.bf16.mxu0 0
    %999 = vmatpush2.bf16.msra.mxu0 0
    %1000 = vmatprep.subr.bf16.mxu0 0
    %1001 = vmatpush2.bf16.msra.mxu0 0
    %1002 = vmatprep.subr.bf16.mxu0 0
    %1003 = vmatpush2.bf16.msra.mxu0 0
    %1004 = vmatprep.subr.bf16.mxu0 0
    %1005 = vmatpush2.bf16.msra.mxu0 0
    %1006 = vmatprep.subr.bf16.mxu0 0
    %1007 = vmatpush2.bf16.msra.mxu0 0
    %1008 = vmatprep.subr.bf16.mxu0 0
    %1009 = vmatpush2.bf16.msra.mxu0 0
    %1010 = vmatprep.mubr.bf16.mxu0 0
    %1011 = vmatmul.mubr.bf16.gmra.mxu0 %v977
    %v1012 = vpop.f32.mrf.mxu0
    %v1013 = vadd.f32 0.0, %v1012
    %v1014 = vpop.f32.mrf.mxu0
    %v1015 = vadd.f32 0.0, %v1014
    %v1016 = vpop.f32.mrf.mxu0
    %v1017 = vpop.f32.mrf.mxu0
    %1018 = vdwg.mxu0
    %1019 = vmatprep.subr.bf16.mxu0 0
    %1020 = vmatpush1.bf16.msra.mxu0 %v418
    %1021 = vmatprep.subr.bf16.mxu0 0
    %1022 = vmatpush1.bf16.msra.mxu0 %v415
    %1023 = vmatprep.subr.bf16.mxu0 0
    %1024 = vmatpush1.bf16.msra.mxu0 %v412
    %1025 = vmatprep.subr.bf16.mxu0 0
    %1026 = vmatpush1.bf16.msra.mxu0 %v409
    %1027 = vmatprep.subr.bf16.mxu0 0
    %1028 = vmatpush1.bf16.msra.mxu0 %v406
    %1029 = vmatprep.subr.bf16.mxu0 0
    %1030 = vmatpush1.bf16.msra.mxu0 %v403
    %1031 = vmatprep.subr.bf16.mxu0 0
    %1032 = vmatpush1.bf16.msra.mxu0 %v400
    %1033 = vmatprep.subr.bf16.mxu0 0
    %1034 = vmatpush1.bf16.msra.mxu0 %v397
    %1035 = vmatprep.subr.bf16.mxu0 0
    %1036 = vmatpush2.bf16.msra.mxu0 0
    %1037 = vmatprep.subr.bf16.mxu0 0
    %1038 = vmatpush2.bf16.msra.mxu0 0
    %1039 = vmatprep.subr.bf16.mxu0 0
    %1040 = vmatpush2.bf16.msra.mxu0 0
    %1041 = vmatprep.subr.bf16.mxu0 0
    %1042 = vmatpush2.bf16.msra.mxu0 0
    %1043 = vmatprep.subr.bf16.mxu0 0
    %1044 = vmatpush2.bf16.msra.mxu0 0
    %1045 = vmatprep.subr.bf16.mxu0 0
    %1046 = vmatpush2.bf16.msra.mxu0 0
    %1047 = vmatprep.subr.bf16.mxu0 0
    %1048 = vmatpush2.bf16.msra.mxu0 0
    %1049 = vmatprep.subr.bf16.mxu0 0
    %1050 = vmatpush2.bf16.msra.mxu0 0
    %1051 = vmatprep.mubr.bf16.mxu0 0
    %1052 = vmatmul.mubr.bf16.gmra.mxu0 %v977
    %v1053 = vpop.f32.mrf.mxu0
    %v1054 = vadd.f32 0.0, %v1053
    %v1055 = vpop.f32.mrf.mxu0
    %v1056 = vpop.f32.mrf.mxu0
    %v1057 = vpop.f32.mrf.mxu0
    %1058 = vdwg.mxu0
    %v1059 = vadd.f32 %v974, %v1013
    %v1060 = vxor.u32 %v1059, 2147483648
    %v1061 = vmul.f32 %v1060, 1.442695
    %v1062 = vpow.pop %v1061
    %v1063 = vadd.f32 %v1062, 1.0
    %v1064 = vrcp.pop %v1063
    %v1065 = vmul.f32 1.0, %v1064
    %v1066 = vadd.f32 %v1015, %v97
    %v1067 = vmul.f32 %v1065, %v1066
    %v1068 = vadd.f32 %v975, %v1067
    %v1069 = vtanh.pop %v1068
    %v1070 = vadd.f32 %v976, %v1054
    %v1071 = vxor.u32 %v1070, 2147483648
    %v1072 = vmul.f32 %v1071, 1.442695
    %v1073 = vpow.pop %v1072
    %v1074 = vadd.f32 %v1073, 1.0
    %v1075 = vrcp.pop %v1074
    %v1076 = vmul.f32 1.0, %v1075
    %v1077 = vsub.f32 1.0, %v1076
    %v1078 = vmul.f32 %v1077, %v1069
    %v1079 = vmul.f32 %v1076, %v973
    %v1080 = vadd.f32 %v1078, %v1079
    %v1081 = vld [vmem:[#allocation2 + $0x90] sm:$0xff]
    %v1082 = vld [vmem:[#allocation2 + $0x98] sm:$0xff]
    %v1083 = vld [vmem:[#allocation2 + $0xa0] sm:$0xff]
    %v1084 = vpack.c.bf16 %v1080, %v1080
    %1085 = vmatprep.subr.bf16.mxu0 %v417
    %1086 = vmatpush1.bf16.msra.mxu0 %v416
    %1087 = vmatprep.subr.bf16.mxu0 %v414
    %1088 = vmatpush1.bf16.msra.mxu0 %v413
    %1089 = vmatprep.subr.bf16.mxu0 %v411
    %1090 = vmatpush1.bf16.msra.mxu0 %v410
    %1091 = vmatprep.subr.bf16.mxu0 %v408
    %1092 = vmatpush1.bf16.msra.mxu0 %v407
    %1093 = vmatprep.subr.bf16.mxu0 %v405
    %1094 = vmatpush1.bf16.msra.mxu0 %v404
    %1095 = vmatprep.subr.bf16.mxu0 %v402
    %1096 = vmatpush1.bf16.msra.mxu0 %v401
    %1097 = vmatprep.subr.bf16.mxu0 %v399
    %1098 = vmatpush1.bf16.msra.mxu0 %v398
    %1099 = vmatprep.subr.bf16.mxu0 %v396
    %1100 = vmatpush1.bf16.msra.mxu0 %v395
    %1101 = vmatprep.subr.bf16.mxu0 0
    %1102 = vmatpush2.bf16.msra.mxu0 0
    %1103 = vmatprep.subr.bf16.mxu0 0
    %1104 = vmatpush2.bf16.msra.mxu0 0
    %1105 = vmatprep.subr.bf16.mxu0 0
    %1106 = vmatpush2.bf16.msra.mxu0 0
    %1107 = vmatprep.subr.bf16.mxu0 0
    %1108 = vmatpush2.bf16.msra.mxu0 0
    %1109 = vmatprep.subr.bf16.mxu0 0
    %1110 = vmatpush2.bf16.msra.mxu0 0
    %1111 = vmatprep.subr.bf16.mxu0 0
    %1112 = vmatpush2.bf16.msra.mxu0 0
    %1113 = vmatprep.subr.bf16.mxu0 0
    %1114 = vmatpush2.bf16.msra.mxu0 0
    %1115 = vmatprep.subr.bf16.mxu0 0
    %1116 = vmatpush2.bf16.msra.mxu0 0
    %1117 = vmatprep.mubr.bf16.mxu0 0
    %1118 = vmatmul.mubr.bf16.gmra.mxu0 %v1084
    %v1119 = vpop.f32.mrf.mxu0
    %v1120 = vadd.f32 0.0, %v1119
    %v1121 = vpop.f32.mrf.mxu0
    %v1122 = vadd.f32 0.0, %v1121
    %v1123 = vpop.f32.mrf.mxu0
    %v1124 = vpop.f32.mrf.mxu0
    %1125 = vdwg.mxu0
    %1126 = vmatprep.subr.bf16.mxu0 0
    %1127 = vmatpush1.bf16.msra.mxu0 %v418
    %1128 = vmatprep.subr.bf16.mxu0 0
    %1129 = vmatpush1.bf16.msra.mxu0 %v415
    %1130 = vmatprep.subr.bf16.mxu0 0
    %1131 = vmatpush1.bf16.msra.mxu0 %v412
    %1132 = vmatprep.subr.bf16.mxu0 0
    %1133 = vmatpush1.bf16.msra.mxu0 %v409
    %1134 = vmatprep.subr.bf16.mxu0 0
    %1135 = vmatpush1.bf16.msra.mxu0 %v406
    %1136 = vmatprep.subr.bf16.mxu0 0
    %1137 = vmatpush1.bf16.msra.mxu0 %v403
    %1138 = vmatprep.subr.bf16.mxu0 0
    %1139 = vmatpush1.bf16.msra.mxu0 %v400
    %1140 = vmatprep.subr.bf16.mxu0 0
    %1141 = vmatpush1.bf16.msra.mxu0 %v397
    %1142 = vmatprep.subr.bf16.mxu0 0
    %1143 = vmatpush2.bf16.msra.mxu0 0
    %1144 = vmatprep.subr.bf16.mxu0 0
    %1145 = vmatpush2.bf16.msra.mxu0 0
    %1146 = vmatprep.subr.bf16.mxu0 0
    %1147 = vmatpush2.bf16.msra.mxu0 0
    %1148 = vmatprep.subr.bf16.mxu0 0
    %1149 = vmatpush2.bf16.msra.mxu0 0
    %1150 = vmatprep.subr.bf16.mxu0 0
    %1151 = vmatpush2.bf16.msra.mxu0 0
    %1152 = vmatprep.subr.bf16.mxu0 0
    %1153 = vmatpush2.bf16.msra.mxu0 0
    %1154 = vmatprep.subr.bf16.mxu0 0
    %1155 = vmatpush2.bf16.msra.mxu0 0
    %1156 = vmatprep.subr.bf16.mxu0 0
    %1157 = vmatpush2.bf16.msra.mxu0 0
    %1158 = vmatprep.mubr.bf16.mxu0 0
    %1159 = vmatmul.mubr.bf16.gmra.mxu0 %v1084
    %v1160 = vpop.f32.mrf.mxu0
    %v1161 = vadd.f32 0.0, %v1160
    %v1162 = vpop.f32.mrf.mxu0
    %v1163 = vpop.f32.mrf.mxu0
    %v1164 = vpop.f32.mrf.mxu0
    %1165 = vdwg.mxu0
    %v1166 = vadd.f32 %v1081, %v1120
    %v1167 = vxor.u32 %v1166, 2147483648
    %v1168 = vmul.f32 %v1167, 1.442695
    %v1169 = vpow.pop %v1168
    %v1170 = vadd.f32 %v1169, 1.0
    %v1171 = vrcp.pop %v1170
    %v1172 = vmul.f32 1.0, %v1171
    %v1173 = vadd.f32 %v1122, %v97
    %v1174 = vmul.f32 %v1172, %v1173
    %v1175 = vadd.f32 %v1082, %v1174
    %v1176 = vtanh.pop %v1175
    %v1177 = vadd.f32 %v1083, %v1161
    %v1178 = vxor.u32 %v1177, 2147483648
    %v1179 = vmul.f32 %v1178, 1.442695
    %v1180 = vpow.pop %v1179
    %v1181 = vadd.f32 %v1180, 1.0
    %v1182 = vrcp.pop %v1181
    %v1183 = vmul.f32 1.0, %v1182
    %v1184 = vsub.f32 1.0, %v1183
    %v1185 = vmul.f32 %v1184, %v1176
    %v1186 = vmul.f32 %v1183, %v1080
    %v1187 = vadd.f32 %v1185, %v1186
    %v1188 = vld [vmem:[#allocation2 + $0xa8] sm:$0xff]
    %v1189 = vld [vmem:[#allocation2 + $0xb0] sm:$0xff]
    %v1190 = vld [vmem:[#allocation2 + $0xb8] sm:$0xff]
    %v1191 = vpack.c.bf16 %v1187, %v1187
    %1192 = vmatprep.subr.bf16.mxu0 %v417
    %1193 = vmatpush1.bf16.msra.mxu0 %v416
    %1194 = vmatprep.subr.bf16.mxu0 %v414
    %1195 = vmatpush1.bf16.msra.mxu0 %v413
    %1196 = vmatprep.subr.bf16.mxu0 %v411
    %1197 = vmatpush1.bf16.msra.mxu0 %v410
    %1198 = vmatprep.subr.bf16.mxu0 %v408
    %1199 = vmatpush1.bf16.msra.mxu0 %v407
    %1200 = vmatprep.subr.bf16.mxu0 %v405
    %1201 = vmatpush1.bf16.msra.mxu0 %v404
    %1202 = vmatprep.subr.bf16.mxu0 %v402
    %1203 = vmatpush1.bf16.msra.mxu0 %v401
    %1204 = vmatprep.subr.bf16.mxu0 %v399
    %1205 = vmatpush1.bf16.msra.mxu0 %v398
    %1206 = vmatprep.subr.bf16.mxu0 %v396
    %1207 = vmatpush1.bf16.msra.mxu0 %v395
    %1208 = vmatprep.subr.bf16.mxu0 0
    %1209 = vmatpush2.bf16.msra.mxu0 0
    %1210 = vmatprep.subr.bf16.mxu0 0
    %1211 = vmatpush2.bf16.msra.mxu0 0
    %1212 = vmatprep.subr.bf16.mxu0 0
    %1213 = vmatpush2.bf16.msra.mxu0 0
    %1214 = vmatprep.subr.bf16.mxu0 0
    %1215 = vmatpush2.bf16.msra.mxu0 0
    %1216 = vmatprep.subr.bf16.mxu0 0
    %1217 = vmatpush2.bf16.msra.mxu0 0
    %1218 = vmatprep.subr.bf16.mxu0 0
    %1219 = vmatpush2.bf16.msra.mxu0 0
    %1220 = vmatprep.subr.bf16.mxu0 0
    %1221 = vmatpush2.bf16.msra.mxu0 0
    %1222 = vmatprep.subr.bf16.mxu0 0
    %1223 = vmatpush2.bf16.msra.mxu0 0
    %1224 = vmatprep.mubr.bf16.mxu0 0
    %1225 = vmatmul.mubr.bf16.gmra.mxu0 %v1191
    %v1226 = vpop.f32.mrf.mxu0
    %v1227 = vadd.f32 0.0, %v1226
    %v1228 = vpop.f32.mrf.mxu0
    %v1229 = vadd.f32 0.0, %v1228
    %v1230 = vpop.f32.mrf.mxu0
    %v1231 = vpop.f32.mrf.mxu0
    %1232 = vdwg.mxu0
    %1233 = vmatprep.subr.bf16.mxu0 0
    %1234 = vmatpush1.bf16.msra.mxu0 %v418
    %1235 = vmatprep.subr.bf16.mxu0 0
    %1236 = vmatpush1.bf16.msra.mxu0 %v415
    %1237 = vmatprep.subr.bf16.mxu0 0
    %1238 = vmatpush1.bf16.msra.mxu0 %v412
    %1239 = vmatprep.subr.bf16.mxu0 0
    %1240 = vmatpush1.bf16.msra.mxu0 %v409
    %1241 = vmatprep.subr.bf16.mxu0 0
    %1242 = vmatpush1.bf16.msra.mxu0 %v406
    %1243 = vmatprep.subr.bf16.mxu0 0
    %1244 = vmatpush1.bf16.msra.mxu0 %v403
    %1245 = vmatprep.subr.bf16.mxu0 0
    %1246 = vmatpush1.bf16.msra.mxu0 %v400
    %1247 = vmatprep.subr.bf16.mxu0 0
    %1248 = vmatpush1.bf16.msra.mxu0 %v397
    %1249 = vmatprep.subr.bf16.mxu0 0
    %1250 = vmatpush2.bf16.msra.mxu0 0
    %1251 = vmatprep.subr.bf16.mxu0 0
    %1252 = vmatpush2.bf16.msra.mxu0 0
    %1253 = vmatprep.subr.bf16.mxu0 0
    %1254 = vmatpush2.bf16.msra.mxu0 0
    %1255 = vmatprep.subr.bf16.mxu0 0
    %1256 = vmatpush2.bf16.msra.mxu0 0
    %1257 = vmatprep.subr.bf16.mxu0 0
    %1258 = vmatpush2.bf16.msra.mxu0 0
    %1259 = vmatprep.subr.bf16.mxu0 0
    %1260 = vmatpush2.bf16.msra.mxu0 0
    %1261 = vmatprep.subr.bf16.mxu0 0
    %1262 = vmatpush2.bf16.msra.mxu0 0
    %1263 = vmatprep.subr.bf16.mxu0 0
    %1264 = vmatpush2.bf16.msra.mxu0 0
    %1265 = vmatprep.mubr.bf16.mxu0 0
    %1266 = vmatmul.mubr.bf16.gmra.mxu0 %v1191
    %v1267 = vpop.f32.mrf.mxu0
    %v1268 = vadd.f32 0.0, %v1267
    %v1269 = vpop.f32.mrf.mxu0
    %v1270 = vpop.f32.mrf.mxu0
    %v1271 = vpop.f32.mrf.mxu0
    %1272 = vdwg.mxu0
    %v1273 = vadd.f32 %v1188, %v1227
    %v1274 = vxor.u32 %v1273, 2147483648
    %v1275 = vmul.f32 %v1274, 1.442695
    %v1276 = vpow.pop %v1275
    %v1277 = vadd.f32 %v1276, 1.0
    %v1278 = vrcp.pop %v1277
    %v1279 = vmul.f32 1.0, %v1278
    %v1280 = vadd.f32 %v1229, %v97
    %v1281 = vmul.f32 %v1279, %v1280
    %v1282 = vadd.f32 %v1189, %v1281
    %v1283 = vtanh.pop %v1282
    %v1284 = vadd.f32 %v1190, %v1268
    %v1285 = vxor.u32 %v1284, 2147483648
    %v1286 = vmul.f32 %v1285, 1.442695
    %v1287 = vpow.pop %v1286
    %v1288 = vadd.f32 %v1287, 1.0
    %v1289 = vrcp.pop %v1288
    %v1290 = vmul.f32 1.0, %v1289
    %v1291 = vsub.f32 1.0, %v1290
    %v1292 = vmul.f32 %v1291, %v1283
    %v1293 = vmul.f32 %v1290, %v1187
    %v1294 = vadd.f32 %v1292, %v1293
    %v1295 = vpack.c.bf16 %v53, %v53
    %v1297 = vlaneseq
    %v1298 = vshrl.u32 %v1297, 7
    %v1299 = vsub.s32 0, %v1298
    %v1300 = vrot.slane %v96, %v1299
    %v1301 = vlaneseq
    %v1302 = vshrl.u32 %v1301, 7
    %v1303 = vsub.s32 1, %v1302
    %v1304 = vrot.slane %v96, %v1303
    %v1305 = vlaneseq
    %v1306 = vshrl.u32 %v1305, 7
    %v1307 = vsub.s32 2, %v1306
    %v1308 = vrot.slane %v96, %v1307
    %v1316 = vunpack.c.l.b16 %v58
    %v1317 = vunpack.c.h.b16 %v58
    %v1318 = vunpack.c.l.b16 %v59
    %v1319 = vunpack.c.l.b16 %v60
    %v1320 = vunpack.c.h.b16 %v60
    %v1321 = vunpack.c.l.b16 %v61
    %v1322 = vpack.c.b16 %v1319, %v1316
    %v1323 = vpack.c.b16 %v1320, %v1317
    %v1324 = vpack.c.b16 %v1321, %v1318
    %v1329 = vsel %vm137, %v1295, 0
    %1331 = vmatprep.subr.bf16.mxu0 0
    %1332 = vmatpush1.bf16.msra.mxu0 0
    %1333 = vmatprep.subr.bf16.mxu0 0
    %1334 = vmatpush1.bf16.msra.mxu0 0
    %1335 = vmatprep.subr.bf16.mxu0 0
    %1336 = vmatpush1.bf16.msra.mxu0 0
    %1337 = vmatprep.subr.bf16.mxu0 0
    %1338 = vmatpush1.bf16.msra.mxu0 0
    %1339 = vmatprep.subr.bf16.mxu0 0
    %1340 = vmatpush1.bf16.msra.mxu0 0
    %1341 = vmatprep.subr.bf16.mxu0 0
    %1342 = vmatpush1.bf16.msra.mxu0 0
    %1343 = vmatprep.subr.bf16.mxu0 0
    %1344 = vmatpush1.bf16.msra.mxu0 0
    %1345 = vmatprep.subr.bf16.mxu0 %v1323
    %1346 = vmatpush1.bf16.msra.mxu0 %v1322
    %1347 = vmatprep.subr.bf16.mxu0 0
    %1348 = vmatpush2.bf16.msra.mxu0 0
    %1349 = vmatprep.subr.bf16.mxu0 0
    %1350 = vmatpush2.bf16.msra.mxu0 0
    %1351 = vmatprep.subr.bf16.mxu0 0
    %1352 = vmatpush2.bf16.msra.mxu0 0
    %1353 = vmatprep.subr.bf16.mxu0 0
    %1354 = vmatpush2.bf16.msra.mxu0 0
    %1355 = vmatprep.subr.bf16.mxu0 0
    %1356 = vmatpush2.bf16.msra.mxu0 0
    %1357 = vmatprep.subr.bf16.mxu0 0
    %1358 = vmatpush2.bf16.msra.mxu0 0
    %1359 = vmatprep.subr.bf16.mxu0 0
    %1360 = vmatpush2.bf16.msra.mxu0 0
    %1361 = vmatprep.subr.bf16.mxu0 0
    %1362 = vmatpush2.bf16.msra.mxu0 0
    %1363 = vmatprep.mubr.bf16.mxu0 0
    %1364 = vmatmul.mubr.bf16.gmra.mxu0 %v1329
    %v1365 = vpop.f32.mrf.mxu0
    %v1366 = vadd.f32 %v1300, %v1365
    %v1367 = vpop.f32.mrf.mxu0
    %v1368 = vadd.f32 %v1304, %v1367
    %v1369 = vpop.f32.mrf.mxu0
    %v1370 = vpop.f32.mrf.mxu0
    %1371 = vdwg.mxu0
    %1372 = vmatprep.subr.bf16.mxu0 0
    %1373 = vmatpush1.bf16.msra.mxu0 0
    %1374 = vmatprep.subr.bf16.mxu0 0
    %1375 = vmatpush1.bf16.msra.mxu0 0
    %1376 = vmatprep.subr.bf16.mxu0 0
    %1377 = vmatpush1.bf16.msra.mxu0 0
    %1378 = vmatprep.subr.bf16.mxu0 0
    %1379 = vmatpush1.bf16.msra.mxu0 0
    %1380 = vmatprep.subr.bf16.mxu0 0
    %1381 = vmatpush1.bf16.msra.mxu0 0
    %1382 = vmatprep.subr.bf16.mxu0 0
    %1383 = vmatpush1.bf16.msra.mxu0 0
    %1384 = vmatprep.subr.bf16.mxu0 0
    %1385 = vmatpush1.bf16.msra.mxu0 0
    %1386 = vmatprep.subr.bf16.mxu0 0
    %1387 = vmatpush1.bf16.msra.mxu0 %v1324
    %1388 = vmatprep.subr.bf16.mxu0 0
    %1389 = vmatpush2.bf16.msra.mxu0 0
    %1390 = vmatprep.subr.bf16.mxu0 0
    %1391 = vmatpush2.bf16.msra.mxu0 0
    %1392 = vmatprep.subr.bf16.mxu0 0
    %1393 = vmatpush2.bf16.msra.mxu0 0
    %1394 = vmatprep.subr.bf16.mxu0 0
    %1395 = vmatpush2.bf16.msra.mxu0 0
    %1396 = vmatprep.subr.bf16.mxu0 0
    %1397 = vmatpush2.bf16.msra.mxu0 0
    %1398 = vmatprep.subr.bf16.mxu0 0
    %1399 = vmatpush2.bf16.msra.mxu0 0
    %1400 = vmatprep.subr.bf16.mxu0 0
    %1401 = vmatpush2.bf16.msra.mxu0 0
    %1402 = vmatprep.subr.bf16.mxu0 0
    %1403 = vmatpush2.bf16.msra.mxu0 0
    %1404 = vmatprep.mubr.bf16.mxu0 0
    %1405 = vmatmul.mubr.bf16.gmra.mxu0 %v1329
    %v1406 = vpop.f32.mrf.mxu0
    %v1407 = vadd.f32 %v1308, %v1406
    %v1408 = vpop.f32.mrf.mxu0
    %v1409 = vpop.f32.mrf.mxu0
    %v1410 = vpop.f32.mrf.mxu0
    %1411 = vdwg.mxu0
    %v1412 = vxor.u32 %v1366, 2147483648
    %v1413 = vmul.f32 %v1412, 1.442695
    %v1414 = vpow.pop %v1413
    %v1415 = vadd.f32 %v1414, 1.0
    %v1416 = vrcp.pop %v1415
    %v1417 = vmul.f32 1.0, %v1416
    %v1418 = vmul.f32 %v1417, %v98
    %v1419 = vadd.f32 %v1368, %v1418
    %v1420 = vtanh.pop %v1419
    %v1421 = vxor.u32 %v1407, 2147483648
    %v1422 = vmul.f32 %v1421, 1.442695
    %v1423 = vpow.pop %v1422
    %v1424 = vadd.f32 %v1423, 1.0
    %v1425 = vrcp.pop %v1424
    %v1426 = vmul.f32 1.0, %v1425
    %v1427 = vsub.f32 1.0, %v1426
    %v1428 = vmul.f32 %v1427, %v1420
    %v1429 = vld [vmem:[#allocation5] sm:$0xf]
    %v1430 = vld [vmem:[#allocation5 + $0x4] sm:$0xf]
    %v1431 = vld [vmem:[#allocation5 + $0x8] sm:$0xf]
    %v1432 = vld [vmem:[#allocation5 + $0xc] sm:$0xf]
    %v1433 = vld [vmem:[#allocation5 + $0x10] sm:$0xf]
    %v1434 = vld [vmem:[#allocation5 + $0x14] sm:$0xf]
    %v1435 = vld [vmem:[#allocation5 + $0x18] sm:$0xf]
    %v1436 = vld [vmem:[#allocation5 + $0x1c] sm:$0xf]
    %v1437 = vld [vmem:[#allocation5 + $0x20] sm:$0xf]
    %v1438 = vld [vmem:[#allocation5 + $0x24] sm:$0xf]
    %v1439 = vld [vmem:[#allocation5 + $0x28] sm:$0xf]
    %v1440 = vld [vmem:[#allocation5 + $0x2c] sm:$0xf]
    %v1441 = vld [vmem:[#allocation5 + $0x30] sm:$0xf]
    %v1442 = vld [vmem:[#allocation5 + $0x34] sm:$0xf]
    %v1443 = vld [vmem:[#allocation5 + $0x38] sm:$0xf]
    %v1444 = vld [vmem:[#allocation5 + $0x3c] sm:$0xf]
    %v1445 = vld [vmem:[#allocation5 + $0x40] sm:$0xf]
    %v1446 = vld [vmem:[#allocation5 + $0x44] sm:$0xf]
    %v1447 = vld [vmem:[#allocation5 + $0x48] sm:$0xf]
    %v1448 = vld [vmem:[#allocation5 + $0x4c] sm:$0xf]
    %v1449 = vld [vmem:[#allocation5 + $0x50] sm:$0xf]
    %v1450 = vld [vmem:[#allocation5 + $0x54] sm:$0xf]
    %v1451 = vld [vmem:[#allocation5 + $0x58] sm:$0xf]
    %v1452 = vld [vmem:[#allocation5 + $0x5c] sm:$0xf]
    %v1453 = vld [vmem:[#allocation5 + $0x60] sm:$0xf]
    %v1454 = vld [vmem:[#allocation5 + $0x64] sm:$0xf]
    %v1455 = vld [vmem:[#allocation5 + $0x68] sm:$0xf]
    %v1456 = vld [vmem:[#allocation5 + $0x6c] sm:$0xf]
    %v1457 = vld [vmem:[#allocation5 + $0x70] sm:$0xf]
    %v1458 = vld [vmem:[#allocation5 + $0x74] sm:$0xf]
    %v1459 = vld [vmem:[#allocation5 + $0x78] sm:$0xf]
    %v1460 = vld [vmem:[#allocation5 + $0x7c] sm:$0xf]
    %v1461 = vld [vmem:[#allocation5 + $0x80] sm:$0xf]
    %v1462 = vld [vmem:[#allocation5 + $0x84] sm:$0xf]
    %v1463 = vld [vmem:[#allocation5 + $0x88] sm:$0xf]
    %v1464 = vld [vmem:[#allocation5 + $0x8c] sm:$0xf]
    %v1465 = vld [vmem:[#allocation5 + $0x90] sm:$0xf]
    %v1466 = vld [vmem:[#allocation5 + $0x94] sm:$0xf]
    %v1467 = vld [vmem:[#allocation5 + $0x98] sm:$0xf]
    %v1468 = vld [vmem:[#allocation5 + $0x9c] sm:$0xf]
    %v1469 = vld [vmem:[#allocation5 + $0xa0] sm:$0xf]
    %v1470 = vld [vmem:[#allocation5 + $0xa4] sm:$0xf]
    %v1471 = vld [vmem:[#allocation5 + $0xa8] sm:$0xf]
    %v1472 = vld [vmem:[#allocation5 + $0xac] sm:$0xf]
    %v1473 = vld [vmem:[#allocation5 + $0xb0] sm:$0xf]
    %v1474 = vld [vmem:[#allocation5 + $0xb4] sm:$0xf]
    %v1475 = vld [vmem:[#allocation5 + $0xb8] sm:$0xf]
    %v1476 = vld [vmem:[#allocation5 + $0xbc] sm:$0xf]
    %v1477 = vpack.c.bf16 %v1294, %v1294
    %v1478 = vpack.c.bf16 %v1428, %v1428
    %v1511 = vunpack.c.l.b16 %v1429
    %v1512 = vunpack.c.l.b16 %v1430
    %v1513 = vunpack.c.l.b16 %v1431
    %v1514 = vunpack.c.l.b16 %v1432
    %v1515 = vunpack.c.l.b16 %v1433
    %v1516 = vunpack.c.l.b16 %v1434
    %v1517 = vunpack.c.l.b16 %v1435
    %v1518 = vunpack.c.l.b16 %v1436
    %v1519 = vunpack.c.l.b16 %v1437
    %v1520 = vunpack.c.l.b16 %v1438
    %v1521 = vunpack.c.l.b16 %v1439
    %v1522 = vunpack.c.l.b16 %v1440
    %v1523 = vunpack.c.l.b16 %v1441
    %v1524 = vunpack.c.l.b16 %v1442
    %v1525 = vunpack.c.l.b16 %v1443
    %v1526 = vunpack.c.l.b16 %v1444
    %v1527 = vunpack.c.l.b16 %v1445
    %v1528 = vunpack.c.l.b16 %v1446
    %v1529 = vunpack.c.l.b16 %v1447
    %v1530 = vunpack.c.l.b16 %v1448
    %v1531 = vunpack.c.l.b16 %v1449
    %v1532 = vunpack.c.l.b16 %v1450
    %v1533 = vunpack.c.l.b16 %v1451
    %v1534 = vunpack.c.l.b16 %v1452
    %v1535 = vunpack.c.l.b16 %v1453
    %v1536 = vunpack.c.l.b16 %v1454
    %v1537 = vunpack.c.l.b16 %v1455
    %v1538 = vunpack.c.l.b16 %v1456
    %v1539 = vunpack.c.l.b16 %v1457
    %v1540 = vunpack.c.l.b16 %v1458
    %v1541 = vunpack.c.l.b16 %v1459
    %v1542 = vunpack.c.l.b16 %v1460
    %v1543 = vpack.c.b16 %v1512, %v1511
    %v1544 = vpack.c.b16 %v1514, %v1513
    %v1545 = vpack.c.b16 %v1516, %v1515
    %v1546 = vpack.c.b16 %v1518, %v1517
    %v1547 = vpack.c.b16 %v1520, %v1519
    %v1548 = vpack.c.b16 %v1522, %v1521
    %v1549 = vpack.c.b16 %v1524, %v1523
    %v1550 = vpack.c.b16 %v1526, %v1525
    %v1551 = vpack.c.b16 %v1528, %v1527
    %v1552 = vpack.c.b16 %v1530, %v1529
    %v1553 = vpack.c.b16 %v1532, %v1531
    %v1554 = vpack.c.b16 %v1534, %v1533
    %v1555 = vpack.c.b16 %v1536, %v1535
    %v1556 = vpack.c.b16 %v1538, %v1537
    %v1557 = vpack.c.b16 %v1540, %v1539
    %v1558 = vpack.c.b16 %v1542, %v1541
    %1575 = vmatprep.subr.bf16.mxu0 0
    %1576 = vmatpush1.bf16.msra.mxu0 %v1550
    %1577 = vmatprep.subr.bf16.mxu0 0
    %1578 = vmatpush1.bf16.msra.mxu0 %v1549
    %1579 = vmatprep.subr.bf16.mxu0 0
    %1580 = vmatpush1.bf16.msra.mxu0 %v1548
    %1581 = vmatprep.subr.bf16.mxu0 0
    %1582 = vmatpush1.bf16.msra.mxu0 %v1547
    %1583 = vmatprep.subr.bf16.mxu0 0
    %1584 = vmatpush1.bf16.msra.mxu0 %v1546
    %1585 = vmatprep.subr.bf16.mxu0 0
    %1586 = vmatpush1.bf16.msra.mxu0 %v1545
    %1587 = vmatprep.subr.bf16.mxu0 0
    %1588 = vmatpush1.bf16.msra.mxu0 %v1544
    %1589 = vmatprep.subr.bf16.mxu0 0
    %1590 = vmatpush1.bf16.msra.mxu0 %v1543
    %1591 = vmatprep.subr.bf16.mxu0 0
    %1592 = vmatpush2.bf16.msra.mxu0 %v1558
    %1593 = vmatprep.subr.bf16.mxu0 0
    %1594 = vmatpush2.bf16.msra.mxu0 %v1557
    %1595 = vmatprep.subr.bf16.mxu0 0
    %1596 = vmatpush2.bf16.msra.mxu0 %v1556
    %1597 = vmatprep.subr.bf16.mxu0 0
    %1598 = vmatpush2.bf16.msra.mxu0 %v1555
    %1599 = vmatprep.subr.bf16.mxu0 0
    %1600 = vmatpush2.bf16.msra.mxu0 %v1554
    %1601 = vmatprep.subr.bf16.mxu0 0
    %1602 = vmatpush2.bf16.msra.mxu0 %v1553
    %1603 = vmatprep.subr.bf16.mxu0 0
    %1604 = vmatpush2.bf16.msra.mxu0 %v1552
    %1605 = vmatprep.subr.bf16.mxu0 0
    %1606 = vmatpush2.bf16.msra.mxu0 %v1551
    %1607 = vmatprep.mubr.bf16.mxu0 %v1478
    %1608 = vmatmul.mubr.bf16.gmra.mxu0 %v1477
    %v1609 = vpop.f32.mrf.mxu0
    %v1610 = vadd.f32 %v99, %v1609
    %v1611 = vpop.f32.mrf.mxu0
    %v1612 = vpop.f32.mrf.mxu0
    %v1613 = vpop.f32.mrf.mxu0
    %1614 = vdwg.mxu0
    %v1615 = vmax.f32 %v1610, 0.0
    %v1616 = vpack.c.bf16 %v1615, %v1615
    %v1633 = vunpack.c.l.b16 %v1461
    %v1634 = vunpack.c.l.b16 %v1462
    %v1635 = vunpack.c.l.b16 %v1463
    %v1636 = vunpack.c.l.b16 %v1464
    %v1637 = vunpack.c.l.b16 %v1465
    %v1638 = vunpack.c.l.b16 %v1466
    %v1639 = vunpack.c.l.b16 %v1467
    %v1640 = vunpack.c.l.b16 %v1468
    %v1641 = vunpack.c.l.b16 %v1469
    %v1642 = vunpack.c.l.b16 %v1470
    %v1643 = vunpack.c.l.b16 %v1471
    %v1644 = vunpack.c.l.b16 %v1472
    %v1645 = vunpack.c.l.b16 %v1473
    %v1646 = vunpack.c.l.b16 %v1474
    %v1647 = vunpack.c.l.b16 %v1475
    %v1648 = vunpack.c.l.b16 %v1476
    %v1649 = vpack.c.b16 %v1634, %v1633
    %v1650 = vpack.c.b16 %v1636, %v1635
    %v1651 = vpack.c.b16 %v1638, %v1637
    %v1652 = vpack.c.b16 %v1640, %v1639
    %v1653 = vpack.c.b16 %v1642, %v1641
    %v1654 = vpack.c.b16 %v1644, %v1643
    %v1655 = vpack.c.b16 %v1646, %v1645
    %v1656 = vpack.c.b16 %v1648, %v1647
    %1665 = vmatprep.subr.bf16.mxu0 0
    %1666 = vmatpush1.bf16.msra.mxu0 %v1656
    %1667 = vmatprep.subr.bf16.mxu0 0
    %1668 = vmatpush1.bf16.msra.mxu0 %v1655
    %1669 = vmatprep.subr.bf16.mxu0 0
    %1670 = vmatpush1.bf16.msra.mxu0 %v1654
    %1671 = vmatprep.subr.bf16.mxu0 0
    %1672 = vmatpush1.bf16.msra.mxu0 %v1653
    %1673 = vmatprep.subr.bf16.mxu0 0
    %1674 = vmatpush1.bf16.msra.mxu0 %v1652
    %1675 = vmatprep.subr.bf16.mxu0 0
    %1676 = vmatpush1.bf16.msra.mxu0 %v1651
    %1677 = vmatprep.subr.bf16.mxu0 0
    %1678 = vmatpush1.bf16.msra.mxu0 %v1650
    %1679 = vmatprep.subr.bf16.mxu0 0
    %1680 = vmatpush1.bf16.msra.mxu0 %v1649
    %1681 = vmatprep.subr.bf16.mxu0 0
    %1682 = vmatpush2.bf16.msra.mxu0 0
    %1683 = vmatprep.subr.bf16.mxu0 0
    %1684 = vmatpush2.bf16.msra.mxu0 0
    %1685 = vmatprep.subr.bf16.mxu0 0
    %1686 = vmatpush2.bf16.msra.mxu0 0
    %1687 = vmatprep.subr.bf16.mxu0 0
    %1688 = vmatpush2.bf16.msra.mxu0 0
    %1689 = vmatprep.subr.bf16.mxu0 0
    %1690 = vmatpush2.bf16.msra.mxu0 0
    %1691 = vmatprep.subr.bf16.mxu0 0
    %1692 = vmatpush2.bf16.msra.mxu0 0
    %1693 = vmatprep.subr.bf16.mxu0 0
    %1694 = vmatpush2.bf16.msra.mxu0 0
    %1695 = vmatprep.subr.bf16.mxu0 0
    %1696 = vmatpush2.bf16.msra.mxu0 0
    %1697 = vmatprep.mubr.bf16.mxu0 0
    %1698 = vmatmul.mubr.bf16.gmra.mxu0 %v1616
    %v1699 = vpop.f32.mrf.mxu0
    %v1700 = vadd.f32 %v100, %v1699
    %v1701 = vpop.f32.mrf.mxu0
    %v1702 = vpop.f32.mrf.mxu0
    %v1703 = vpop.f32.mrf.mxu0
    %1704 = vdwg.mxu0
    %1705 = vst [vmem:[%s4] sm:$0xff] %v1700
    // Predicated region
    $region26: #{bilstm_1_fc_2_forward.1} parent=1 // pred_check
      _
    $region27: #{bilstm_1_fc_2_forward.1} parent=1 // pred_check_branch
      %1707 = sbr.rel (0) target = $region29
    $region28: #{bilstm_1_fc_2_forward.1} parent=1 // pred_region
      _
    $region29: #{bilstm_1_fc_2_forward.1} parent=1 // pred_fallthru
      _
    // Predicated region
    $region30: #{bilstm_1_fc_2_forward.1} parent=1 // pred_check
      _
    $region31: #{bilstm_1_fc_2_forward.1} parent=1 // pred_check_branch
      %1709 = sbr.rel (0) target = $region33
    $region32: #{bilstm_1_fc_2_forward.1} parent=1 // pred_region
      _
    $region33: #{bilstm_1_fc_2_forward.1} parent=1 // pred_fallthru
      _
    %1710 = vsyncpa [#allocation4], 1
    %1711 = vsyncpa [#allocation6], 1

</llo_original>
